<compile_context>
chip_gen: v5e
topology: v5e:2x2
jax: 0.10.0
libtpu: 0.0.40
codegen_flags: <defaults>
</compile_context>

<pallas_src>
import functools
import math

import jax
import jax.numpy as jnp
from jax import lax
from jax.experimental import pallas as pl
from jax.experimental.pallas import tpu as pltpu


# ----------------------------------------------------------------------------
# Fully fused forward kernel
# ----------------------------------------------------------------------------
def _sum_all(x):
    # Full reduction to a (1, 1) array via two standard axis reductions.
    return jnp.sum(jnp.sum(x, axis=-1, keepdims=True), axis=0, keepdims=True)


def _model_fwd_kernel(x_ref, pw_ref, pb_ref, adj_ref, lh_ref,
                      ew_ref, eb_ref, aw_ref, ab_ref, av_ref,
                      d0w_ref, d0b_ref, d1w_ref, d1b_ref, o_ref,
                      *, modals, n_views, nlayer, num_clusters):
    N = adj_ref.shape[0]
    H = pw_ref.shape[-1]
    V = n_views
    n_items = modals * V              # stacked feature items [t..., m...]
    n_chain = n_items * 2             # x {adj_l, L_hs[modal]}

    # ---- 1. input projections: relu(x @ W + b), per (modal, view) ---------
    zp = []
    for k in range(n_items):
        zp.append(jnp.maximum(
            jnp.dot(x_ref[k], pw_ref[k], preferred_element_type=jnp.float32)
            + pb_ref[k], 0.0))

    # ---- 2. shared GCN encoder: all chains, all layers, fused -------------
    # TODO(synk): GraphEncoder unavailable; GCN layer h <- relu(adj @ (h@W+b))
    #             assumed, dropout treated as identity (eval).
    chain_src, chain_adj = [], []
    for i in range(modals):
        for j in range(V):
            for g in range(2):                  # 0 -> adj_l, 1 -> L_hs[i]
                chain_src.append(i * V + j)
                chain_adj.append((g, i))
    # (n_chain*N, H) flat state: x@W stage uses the full MXU M dimension.
    h = jnp.concatenate([zp[chain_src[c]] for c in range(n_chain)], axis=0)

    for l in range(nlayer):
        w = ew_ref[l]                                        # (H, H) shared
        b = eb_ref[l]                                        # (1, H)
        hw = jnp.dot(h, w, preferred_element_type=jnp.float32) + b
        outs = []
        for c in range(n_chain):
            g, i = chain_adj[c]
            adj = adj_ref[...] if g == 0 else lh_ref[i]      # no duplication
            outs.append(jnp.dot(adj, hw[c * N:(c + 1) * N],
                                preferred_element_type=jnp.float32))
        h = jnp.maximum(jnp.concatenate(outs, axis=0), 0.0)

    def chain(i, j, g):
        c = (i * V + j) * 2 + g
        return h[c * N:(c + 1) * N]

    inv_v = 1.0 / V
    zt_mean_l = sum(chain(0, j, 0) for j in range(V)) * inv_v
    zt_mean_h = sum(chain(0, j, 1) for j in range(V)) * inv_v
    zm_mean_l = sum(chain(1, j, 0) for j in range(V)) * inv_v
    zm_mean_h = sum(chain(1, j, 1) for j in range(V)) * inv_v

    # ---- 3. fusion  TODO(synk): FusionRepresentation unavailable; average -
    z_t = 0.5 * (zt_mean_l + zt_mean_h)
    z_m = 0.5 * (zm_mean_l + zm_mean_h)

    # ---- 4. shared semantic attention --------------------------------------
    # TODO(synk): Attention_shared unavailable; tanh-linear mean scoring +
    #             softmax over the two semantic scores assumed.
    aw = aw_ref[...]
    ab = ab_ref[...]
    av = av_ref[...]

    def att_score(zz):
        hh = jnp.tanh(jnp.dot(zz, aw, preferred_element_type=jnp.float32) + ab)
        sp = jnp.mean(hh, axis=0, keepdims=True)             # (1, H)
        return jnp.sum(sp * av, axis=1, keepdims=True)       # (1, 1)

    s_t = att_score(z_t)
    s_m = att_score(z_m)
    mx = jnp.maximum(s_t, s_m)
    e_t = jnp.exp(s_t - mx)
    e_m = jnp.exp(s_m - mx)
    inv_den = 1.0 / (e_t + e_m)
    z = (e_t * inv_den) * z_t + (e_m * inv_den) * z_m        # (N, H)

    # ---- 5. decoder + SCE reconstruction loss (scalar, no HBM rec) ---------
    # decoder input is concat([z_l, z_h], -1); avoid the concat by splitting
    # the first decoder weight into its two row halves.
    zl_all = jnp.concatenate(
        [chain(i, j, 0) for i in range(modals) for j in range(V)], axis=0)
    zh_all = jnp.concatenate(
        [chain(i, j, 1) for i in range(modals) for j in range(V)], axis=0)
    w0 = d0w_ref[...]                                        # (2H, E)
    hdec = (jnp.dot(zl_all, w0[:H], preferred_element_type=jnp.float32)
            + jnp.dot(zh_all, w0[H:], preferred_element_type=jnp.float32)
            + d0b_ref[...])
    hdec = jnp.where(hdec > 0, hdec, jnp.exp(jnp.minimum(hdec, 0.0)) - 1.0)
    rec = (jnp.dot(hdec, d1w_ref[...], preferred_element_type=jnp.float32)
           + d1b_ref[...])                                   # (n_items*N, F)

    # TODO(synk): sce_loss assumed as mean((1 - cos)^3) (GraphMAE form).
    tgt = jnp.concatenate([x_ref[k] for k in range(n_items)], axis=0)
    rec_n = rec * lax.rsqrt(jnp.sum(rec * rec, axis=-1, keepdims=True) + 1e-12)
    tgt_n = tgt * lax.rsqrt(jnp.sum(tgt * tgt, axis=-1, keepdims=True) + 1e-12)
    d = 1.0 - jnp.sum(rec_n * tgt_n, axis=-1, keepdims=True)
    loss_rec = _sum_all(d * d * d) * (1.0 / (V * N) / (2.0 * V))

    # ---- 6. KL clustering (DEC-style), fully fused to a scalar -------------
    # TODO(synk): KL_clustering (k-means init) unavailable; deterministic
    #             centers = first num_clusters rows of z.
    C = num_clusters
    centers = z[0:C]                                         # (C, H)
    zz = jnp.sum(z * z, axis=-1, keepdims=True)              # (N, 1)
    cc = lax.dot_general(jnp.ones((1, H), jnp.float32), centers * centers,
                         (((1,), (1,)), ((), ())),
                         preferred_element_type=jnp.float32)  # (1, C)
    cross = lax.dot_general(z, centers, (((1,), (1,)), ((), ())),
                            preferred_element_type=jnp.float32)  # (N, C)
    d2 = jnp.maximum(zz + cc - 2.0 * cross, 0.0)
    q = 1.0 / (1.0 + d2)
    q = q / (jnp.sum(q, axis=1, keepdims=True) + 1e-8)
    f = jnp.sum(q, axis=0, keepdims=True)                    # (1, C)
    p = (q * q) / (f + 1e-8)
    p = p / (jnp.sum(p, axis=1, keepdims=True) + 1e-8)
    loss_clu = _sum_all(p * (jnp.log(p + 1e-8) - jnp.log(q + 1e-8))) * (1.0 / N)

    # Reference forward hard-codes lamb = miu = 0 -> contrast terms are 0.
    o_ref[...] = loss_rec + loss_clu


# ----------------------------------------------------------------------------
# Host wrapper: one pallas_call for the whole forward
# ----------------------------------------------------------------------------
def model_forward(params, f_list, adj_l, L_hs, *, modals, num_clusters, tau,
                  lamb=0.0, miu=0.0):
    # tau/lamb/miu kept for signature parity; the reference forward hard-codes
    # lamb = miu = 0, so the contrast branches contribute exactly 0.
    del tau, lamb, miu
    assert modals == 2, "reference forward is written for 2 modalities"
    t_list, m_list = f_list[0], f_list[1]
    V = len(t_list)
    N, F_dim = t_list[0].shape
    H = params["proj_w"].shape[-1]
    E = params["dec0"][0].shape[-1]
    nlayer = params["enc_w"].shape[0]

    x_all = jnp.stack(list(t_list) + list(m_list), axis=0)   # (2V, N, F)
    lhs = jnp.stack(list(L_hs), axis=0)                      # (modals, N, N)

    aw, ab = params["att_fc"]
    w0, b0 = params["dec0"]
    w1, b1 = params["dec1"]

    def fullspec(*shape):
        nd = len(shape)
        return pl.BlockSpec(shape, lambda i, _nd=nd: (0,) * _nd)

    kern = functools.partial(_model_fwd_kernel, modals=modals, n_views=V,
                             nlayer=nlayer, num_clusters=num_clusters)

    out = pl.pallas_call(
        kern,
        out_shape=jax.ShapeDtypeStruct((1, 1), jnp.float32),
        grid=(1,),
        in_specs=[
            fullspec(2 * V, N, F_dim),       # stacked input features
            fullspec(2 * V, F_dim, H),       # projection weights
            fullspec(2 * V, 1, H),           # projection biases
            fullspec(N, N),                  # adj_l (read once, no 8x stack)
            fullspec(modals, N, N),          # L_hs
            fullspec(nlayer, H, H),          # encoder weights (all layers)
            fullspec(nlayer, 1, H),          # encoder biases
            fullspec(H, H),                  # attention fc weight
            fullspec(1, H),                  # attention fc bias
            fullspec(1, H),                  # attention vector
            fullspec(2 * H, E),              # decoder W0
            fullspec(1, E),                  # decoder b0
            fullspec(E, F_dim),              # decoder W1
            fullspec(1, F_dim),              # decoder b1
        ],
        out_specs=fullspec(1, 1),
        compiler_params=pltpu.CompilerParams(
            dimension_semantics=("arbitrary",),
            vmem_limit_bytes=64 * 1024 * 1024),
    )(x_all, params["proj_w"], params["proj_b"], adj_l, lhs,
      params["enc_w"], params["enc_b"], aw, ab, params["att_vec"],
      w0, b0, w1, b1)
    return out[0, 0]


# ----------------------------------------------------------------------------
# Parameter init (deterministic, kaiming-uniform-like)
# ----------------------------------------------------------------------------
def _uniform(key, shape, fan_in):
    bound = math.sqrt(6.0 / max(fan_in, 1))
    return jax.random.uniform(key, shape, jnp.float32, -bound, bound)


def init_params(key, n_views, feats_dim, hidden_dim, embed_dim, nlayer):
    ks = iter(jax.random.split(key, 64))

    def lin(din, dout):
        return (_uniform(next(ks), (din, dout), din),
                _uniform(next(ks), (1, dout), din))

    proj_w, proj_b = [], []
    for _ in range(2 * n_views):                 # [t views..., m views...]
        w, b = lin(feats_dim, hidden_dim)
        proj_w.append(w)
        proj_b.append(b)

    enc_w, enc_b = [], []
    for _ in range(nlayer):
        w, b = lin(hidden_dim, hidden_dim)
        enc_w.append(w)
        enc_b.append(b)

    # contrast_l / contrast_h / contrast params omitted: lamb = miu = 0 in the
    # reference forward, so those branches contribute exactly 0 to the loss.
    return {
        "proj_w": jnp.stack(proj_w, 0),          # (2V, F, H)
        "proj_b": jnp.stack(proj_b, 0),          # (2V, 1, H)
        "enc_w": jnp.stack(enc_w, 0),            # (nlayer, H, H)
        "enc_b": jnp.stack(enc_b, 0),            # (nlayer, 1, H)
        "att_fc": lin(hidden_dim, hidden_dim),
        "att_vec": _uniform(next(ks), (1, hidden_dim), hidden_dim),
        "dec0": lin(2 * hidden_dim, embed_dim),
        "dec1": lin(embed_dim, feats_dim),
    }


# ----------------------------------------------------------------------------
# Main
# ----------------------------------------------------------------------------
if __name__ == "__main__":
    MODALS = 2
    N_NODES = 16
    FEATS_DIM = 32
    HIDDEN_DIM = 32
    EMBED_DIM = 32
    NUM_CLUSTERS = 4
    TAU = 0.5
    NLAYER = 2
    N_VIEWS = 2

    key = jax.random.PRNGKey(0)
    kp, kd = jax.random.split(key)
    params = init_params(kp, N_VIEWS, FEATS_DIM, HIDDEN_DIM, EMBED_DIM, NLAYER)

    dks = iter(jax.random.split(kd, 16))
    t_list = [jax.random.normal(next(dks), (N_NODES, FEATS_DIM), jnp.float32)
              for _ in range(N_VIEWS)]
    m_list = [jax.random.normal(next(dks), (N_NODES, FEATS_DIM), jnp.float32)
              for _ in range(N_VIEWS)]
    f_list = [t_list, m_list]

    def norm_adj(k):
        a = jax.random.uniform(k, (N_NODES, N_NODES), jnp.float32)
        a = (a + a.T) * 0.5 + jnp.eye(N_NODES)
        return a / a.sum(axis=1, keepdims=True)

    adj_l = norm_adj(next(dks))
    L_hs = [jnp.eye(N_NODES) - norm_adj(next(dks)) for _ in range(MODALS)]

    fwd = jax.jit(functools.partial(
        model_forward, modals=MODALS, num_clusters=NUM_CLUSTERS, tau=TAU))
    loss = fwd(params, f_list, adj_l, L_hs)
    loss = jax.block_until_ready(loss)
    assert jnp.isfinite(loss), "loss is not finite"
    print("KERNEL_OK")
</pallas_src>

<mosaic_0001>
module attributes {stable_mosaic.version = 11 : i64} {
  func.func @_model_fwd_kernel(%arg0: i32, %arg1: memref<4x16x32xf32, #tpu.memory_space<vmem>>, %arg2: memref<4x32x32xf32, #tpu.memory_space<vmem>>, %arg3: memref<4x1x32xf32, #tpu.memory_space<vmem>>, %arg4: memref<16x16xf32, #tpu.memory_space<vmem>>, %arg5: memref<2x16x16xf32, #tpu.memory_space<vmem>>, %arg6: memref<2x32x32xf32, #tpu.memory_space<vmem>>, %arg7: memref<2x1x32xf32, #tpu.memory_space<vmem>>, %arg8: memref<32x32xf32, #tpu.memory_space<vmem>>, %arg9: memref<1x32xf32, #tpu.memory_space<vmem>>, %arg10: memref<1x32xf32, #tpu.memory_space<vmem>>, %arg11: memref<64x32xf32, #tpu.memory_space<vmem>>, %arg12: memref<1x32xf32, #tpu.memory_space<vmem>>, %arg13: memref<32x32xf32, #tpu.memory_space<vmem>>, %arg14: memref<1x32xf32, #tpu.memory_space<vmem>>, %arg15: memref<1x1xf32, #tpu.memory_space<vmem>>) attributes {dimension_semantics = [#tpu.dimension_semantics<arbitrary>], iteration_bounds = array<i64: 1>, scalar_prefetch = 0 : i64, scratch_operands = 0 : i64, tpu.core_type = #tpu.core_type<tc>, window_params = [{pipeline_mode = #tpu.pipeline_mode<synchronous>, transform_indices = @transform_0, window_bounds = array<i64: 4, 16, 32>}, {pipeline_mode = #tpu.pipeline_mode<synchronous>, transform_indices = @transform_1, window_bounds = array<i64: 4, 32, 32>}, {pipeline_mode = #tpu.pipeline_mode<synchronous>, transform_indices = @transform_2, window_bounds = array<i64: 4, 1, 32>}, {pipeline_mode = #tpu.pipeline_mode<synchronous>, transform_indices = @transform_3, window_bounds = array<i64: 16, 16>}, {pipeline_mode = #tpu.pipeline_mode<synchronous>, transform_indices = @transform_4, window_bounds = array<i64: 2, 16, 16>}, {pipeline_mode = #tpu.pipeline_mode<synchronous>, transform_indices = @transform_5, window_bounds = array<i64: 2, 32, 32>}, {pipeline_mode = #tpu.pipeline_mode<synchronous>, transform_indices = @transform_6, window_bounds = array<i64: 2, 1, 32>}, {pipeline_mode = #tpu.pipeline_mode<synchronous>, transform_indices = @transform_7, window_bounds = array<i64: 32, 32>}, {pipeline_mode = #tpu.pipeline_mode<synchronous>, transform_indices = @transform_8, window_bounds = array<i64: 1, 32>}, {pipeline_mode = #tpu.pipeline_mode<synchronous>, transform_indices = @transform_9, window_bounds = array<i64: 1, 32>}, {pipeline_mode = #tpu.pipeline_mode<synchronous>, transform_indices = @transform_10, window_bounds = array<i64: 64, 32>}, {pipeline_mode = #tpu.pipeline_mode<synchronous>, transform_indices = @transform_11, window_bounds = array<i64: 1, 32>}, {pipeline_mode = #tpu.pipeline_mode<synchronous>, transform_indices = @transform_12, window_bounds = array<i64: 32, 32>}, {pipeline_mode = #tpu.pipeline_mode<synchronous>, transform_indices = @transform_13, window_bounds = array<i64: 1, 32>}, {pipeline_mode = #tpu.pipeline_mode<synchronous>, transform_indices = @transform_14, window_bounds = array<i64: 1, 1>}]} {
    %c0 = arith.constant 0 : index
    %c0_0 = arith.constant 0 : index
    %c0_1 = arith.constant 0 : index
    %0 = vector.load %arg1[%c0, %c0_0, %c0_1] : memref<4x16x32xf32, #tpu.memory_space<vmem>>, vector<1x16x32xf32>
    %1 = vector.shape_cast %0 : vector<1x16x32xf32> to vector<16x32xf32>
    %c0_2 = arith.constant 0 : index
    %c0_3 = arith.constant 0 : index
    %c0_4 = arith.constant 0 : index
    %2 = vector.load %arg2[%c0_2, %c0_3, %c0_4] : memref<4x32x32xf32, #tpu.memory_space<vmem>>, vector<1x32x32xf32>
    %3 = vector.shape_cast %2 : vector<1x32x32xf32> to vector<32x32xf32>
    %cst = arith.constant dense<0.000000e+00> : vector<16x32xf32>
    %4 = tpu.matmul %1, %3, %cst {dimension_numbers = #tpu.dot_dimension_numbers<[1], [0], [0], [1], [0, 0, 1, 1], [], []>} : vector<16x32xf32>, vector<32x32xf32>, vector<16x32xf32> -> vector<16x32xf32>
    %c0_5 = arith.constant 0 : index
    %c0_6 = arith.constant 0 : index
    %c0_7 = arith.constant 0 : index
    %5 = vector.load %arg3[%c0_5, %c0_6, %c0_7] : memref<4x1x32xf32, #tpu.memory_space<vmem>>, vector<1x1x32xf32>
    %6 = vector.shape_cast %5 : vector<1x1x32xf32> to vector<1x32xf32>
    %7 = vector.broadcast %6 : vector<1x32xf32> to vector<16x32xf32>
    %8 = arith.addf %4, %7 : vector<16x32xf32>
    %cst_8 = arith.constant 0.000000e+00 : f32
    %9 = vector.broadcast %cst_8 : f32 to vector<16x32xf32>
    %10 = arith.maximumf %8, %9 : vector<16x32xf32>
    %c1 = arith.constant 1 : index
    %c0_9 = arith.constant 0 : index
    %c0_10 = arith.constant 0 : index
    %11 = vector.load %arg1[%c1, %c0_9, %c0_10] : memref<4x16x32xf32, #tpu.memory_space<vmem>>, vector<1x16x32xf32>
    %12 = vector.shape_cast %11 : vector<1x16x32xf32> to vector<16x32xf32>
    %c1_11 = arith.constant 1 : index
    %c0_12 = arith.constant 0 : index
    %c0_13 = arith.constant 0 : index
    %13 = vector.load %arg2[%c1_11, %c0_12, %c0_13] : memref<4x32x32xf32, #tpu.memory_space<vmem>>, vector<1x32x32xf32>
    %14 = vector.shape_cast %13 : vector<1x32x32xf32> to vector<32x32xf32>
    %cst_14 = arith.constant dense<0.000000e+00> : vector<16x32xf32>
    %15 = tpu.matmul %12, %14, %cst_14 {dimension_numbers = #tpu.dot_dimension_numbers<[1], [0], [0], [1], [0, 0, 1, 1], [], []>} : vector<16x32xf32>, vector<32x32xf32>, vector<16x32xf32> -> vector<16x32xf32>
    %c1_15 = arith.constant 1 : index
    %c0_16 = arith.constant 0 : index
    %c0_17 = arith.constant 0 : index
    %16 = vector.load %arg3[%c1_15, %c0_16, %c0_17] : memref<4x1x32xf32, #tpu.memory_space<vmem>>, vector<1x1x32xf32>
    %17 = vector.shape_cast %16 : vector<1x1x32xf32> to vector<1x32xf32>
    %18 = vector.broadcast %17 : vector<1x32xf32> to vector<16x32xf32>
    %19 = arith.addf %15, %18 : vector<16x32xf32>
    %cst_18 = arith.constant 0.000000e+00 : f32
    %20 = vector.broadcast %cst_18 : f32 to vector<16x32xf32>
    %21 = arith.maximumf %19, %20 : vector<16x32xf32>
    %c2 = arith.constant 2 : index
    %c0_19 = arith.constant 0 : index
    %c0_20 = arith.constant 0 : index
    %22 = vector.load %arg1[%c2, %c0_19, %c0_20] : memref<4x16x32xf32, #tpu.memory_space<vmem>>, vector<1x16x32xf32>
    %23 = vector.shape_cast %22 : vector<1x16x32xf32> to vector<16x32xf32>
    %c2_21 = arith.constant 2 : index
    %c0_22 = arith.constant 0 : index
    %c0_23 = arith.constant 0 : index
    %24 = vector.load %arg2[%c2_21, %c0_22, %c0_23] : memref<4x32x32xf32, #tpu.memory_space<vmem>>, vector<1x32x32xf32>
    %25 = vector.shape_cast %24 : vector<1x32x32xf32> to vector<32x32xf32>
    %cst_24 = arith.constant dense<0.000000e+00> : vector<16x32xf32>
    %26 = tpu.matmul %23, %25, %cst_24 {dimension_numbers = #tpu.dot_dimension_numbers<[1], [0], [0], [1], [0, 0, 1, 1], [], []>} : vector<16x32xf32>, vector<32x32xf32>, vector<16x32xf32> -> vector<16x32xf32>
    %c2_25 = arith.constant 2 : index
    %c0_26 = arith.constant 0 : index
    %c0_27 = arith.constant 0 : index
    %27 = vector.load %arg3[%c2_25, %c0_26, %c0_27] : memref<4x1x32xf32, #tpu.memory_space<vmem>>, vector<1x1x32xf32>
    %28 = vector.shape_cast %27 : vector<1x1x32xf32> to vector<1x32xf32>
    %29 = vector.broadcast %28 : vector<1x32xf32> to vector<16x32xf32>
    %30 = arith.addf %26, %29 : vector<16x32xf32>
    %cst_28 = arith.constant 0.000000e+00 : f32
    %31 = vector.broadcast %cst_28 : f32 to vector<16x32xf32>
    %32 = arith.maximumf %30, %31 : vector<16x32xf32>
    %c3 = arith.constant 3 : index
    %c0_29 = arith.constant 0 : index
    %c0_30 = arith.constant 0 : index
    %33 = vector.load %arg1[%c3, %c0_29, %c0_30] : memref<4x16x32xf32, #tpu.memory_space<vmem>>, vector<1x16x32xf32>
    %34 = vector.shape_cast %33 : vector<1x16x32xf32> to vector<16x32xf32>
    %c3_31 = arith.constant 3 : index
    %c0_32 = arith.constant 0 : index
    %c0_33 = arith.constant 0 : index
    %35 = vector.load %arg2[%c3_31, %c0_32, %c0_33] : memref<4x32x32xf32, #tpu.memory_space<vmem>>, vector<1x32x32xf32>
    %36 = vector.shape_cast %35 : vector<1x32x32xf32> to vector<32x32xf32>
    %cst_34 = arith.constant dense<0.000000e+00> : vector<16x32xf32>
    %37 = tpu.matmul %34, %36, %cst_34 {dimension_numbers = #tpu.dot_dimension_numbers<[1], [0], [0], [1], [0, 0, 1, 1], [], []>} : vector<16x32xf32>, vector<32x32xf32>, vector<16x32xf32> -> vector<16x32xf32>
    %c3_35 = arith.constant 3 : index
    %c0_36 = arith.constant 0 : index
    %c0_37 = arith.constant 0 : index
    %38 = vector.load %arg3[%c3_35, %c0_36, %c0_37] : memref<4x1x32xf32, #tpu.memory_space<vmem>>, vector<1x1x32xf32>
    %39 = vector.shape_cast %38 : vector<1x1x32xf32> to vector<1x32xf32>
    %40 = vector.broadcast %39 : vector<1x32xf32> to vector<16x32xf32>
    %41 = arith.addf %37, %40 : vector<16x32xf32>
    %cst_38 = arith.constant 0.000000e+00 : f32
    %42 = vector.broadcast %cst_38 : f32 to vector<16x32xf32>
    %43 = arith.maximumf %41, %42 : vector<16x32xf32>
    %44 = tpu.concatenate %10, %10, %21, %21, %32, %32, %43, %43 in 0 : vector<16x32xf32>, vector<16x32xf32>, vector<16x32xf32>, vector<16x32xf32>, vector<16x32xf32>, vector<16x32xf32>, vector<16x32xf32>, vector<16x32xf32> -> vector<128x32xf32>
    %c0_39 = arith.constant 0 : index
    %c0_40 = arith.constant 0 : index
    %c0_41 = arith.constant 0 : index
    %45 = vector.load %arg6[%c0_39, %c0_40, %c0_41] : memref<2x32x32xf32, #tpu.memory_space<vmem>>, vector<1x32x32xf32>
    %46 = vector.shape_cast %45 : vector<1x32x32xf32> to vector<32x32xf32>
    %c0_42 = arith.constant 0 : index
    %c0_43 = arith.constant 0 : index
    %c0_44 = arith.constant 0 : index
    %47 = vector.load %arg7[%c0_42, %c0_43, %c0_44] : memref<2x1x32xf32, #tpu.memory_space<vmem>>, vector<1x1x32xf32>
    %48 = vector.shape_cast %47 : vector<1x1x32xf32> to vector<1x32xf32>
    %cst_45 = arith.constant dense<0.000000e+00> : vector<128x32xf32>
    %49 = tpu.matmul %44, %46, %cst_45 {dimension_numbers = #tpu.dot_dimension_numbers<[1], [0], [0], [1], [0, 0, 1, 1], [], []>} : vector<128x32xf32>, vector<32x32xf32>, vector<128x32xf32> -> vector<128x32xf32>
    %50 = vector.broadcast %48 : vector<1x32xf32> to vector<128x32xf32>
    %51 = arith.addf %49, %50 : vector<128x32xf32>
    %c0_46 = arith.constant 0 : index
    %c0_47 = arith.constant 0 : index
    %52 = vector.load %arg4[%c0_46, %c0_47] : memref<16x16xf32, #tpu.memory_space<vmem>>, vector<16x16xf32>
    %53 = vector.extract_strided_slice %51 {offsets = [0, 0], sizes = [16, 32], strides = [1, 1]} : vector<128x32xf32> to vector<16x32xf32>
    %cst_48 = arith.constant dense<0.000000e+00> : vector<16x32xf32>
    %54 = tpu.matmul %52, %53, %cst_48 {dimension_numbers = #tpu.dot_dimension_numbers<[1], [0], [0], [1], [0, 0, 1, 1], [], []>} : vector<16x16xf32>, vector<16x32xf32>, vector<16x32xf32> -> vector<16x32xf32>
    %c0_49 = arith.constant 0 : index
    %c0_50 = arith.constant 0 : index
    %c0_51 = arith.constant 0 : index
    %55 = vector.load %arg5[%c0_49, %c0_50, %c0_51] : memref<2x16x16xf32, #tpu.memory_space<vmem>>, vector<1x16x16xf32>
    %56 = vector.shape_cast %55 : vector<1x16x16xf32> to vector<16x16xf32>
    %57 = vector.extract_strided_slice %51 {offsets = [16, 0], sizes = [16, 32], strides = [1, 1]} : vector<128x32xf32> to vector<16x32xf32>
    %cst_52 = arith.constant dense<0.000000e+00> : vector<16x32xf32>
    %58 = tpu.matmul %56, %57, %cst_52 {dimension_numbers = #tpu.dot_dimension_numbers<[1], [0], [0], [1], [0, 0, 1, 1], [], []>} : vector<16x16xf32>, vector<16x32xf32>, vector<16x32xf32> -> vector<16x32xf32>
    %c0_53 = arith.constant 0 : index
    %c0_54 = arith.constant 0 : index
    %59 = vector.load %arg4[%c0_53, %c0_54] : memref<16x16xf32, #tpu.memory_space<vmem>>, vector<16x16xf32>
    %60 = vector.extract_strided_slice %51 {offsets = [32, 0], sizes = [16, 32], strides = [1, 1]} : vector<128x32xf32> to vector<16x32xf32>
    %cst_55 = arith.constant dense<0.000000e+00> : vector<16x32xf32>
    %61 = tpu.matmul %59, %60, %cst_55 {dimension_numbers = #tpu.dot_dimension_numbers<[1], [0], [0], [1], [0, 0, 1, 1], [], []>} : vector<16x16xf32>, vector<16x32xf32>, vector<16x32xf32> -> vector<16x32xf32>
    %c0_56 = arith.constant 0 : index
    %c0_57 = arith.constant 0 : index
    %c0_58 = arith.constant 0 : index
    %62 = vector.load %arg5[%c0_56, %c0_57, %c0_58] : memref<2x16x16xf32, #tpu.memory_space<vmem>>, vector<1x16x16xf32>
    %63 = vector.shape_cast %62 : vector<1x16x16xf32> to vector<16x16xf32>
    %64 = vector.extract_strided_slice %51 {offsets = [48, 0], sizes = [16, 32], strides = [1, 1]} : vector<128x32xf32> to vector<16x32xf32>
    %cst_59 = arith.constant dense<0.000000e+00> : vector<16x32xf32>
    %65 = tpu.matmul %63, %64, %cst_59 {dimension_numbers = #tpu.dot_dimension_numbers<[1], [0], [0], [1], [0, 0, 1, 1], [], []>} : vector<16x16xf32>, vector<16x32xf32>, vector<16x32xf32> -> vector<16x32xf32>
    %c0_60 = arith.constant 0 : index
    %c0_61 = arith.constant 0 : index
    %66 = vector.load %arg4[%c0_60, %c0_61] : memref<16x16xf32, #tpu.memory_space<vmem>>, vector<16x16xf32>
    %67 = vector.extract_strided_slice %51 {offsets = [64, 0], sizes = [16, 32], strides = [1, 1]} : vector<128x32xf32> to vector<16x32xf32>
    %cst_62 = arith.constant dense<0.000000e+00> : vector<16x32xf32>
    %68 = tpu.matmul %66, %67, %cst_62 {dimension_numbers = #tpu.dot_dimension_numbers<[1], [0], [0], [1], [0, 0, 1, 1], [], []>} : vector<16x16xf32>, vector<16x32xf32>, vector<16x32xf32> -> vector<16x32xf32>
    %c1_63 = arith.constant 1 : index
    %c0_64 = arith.constant 0 : index
    %c0_65 = arith.constant 0 : index
    %69 = vector.load %arg5[%c1_63, %c0_64, %c0_65] : memref<2x16x16xf32, #tpu.memory_space<vmem>>, vector<1x16x16xf32>
    %70 = vector.shape_cast %69 : vector<1x16x16xf32> to vector<16x16xf32>
    %71 = vector.extract_strided_slice %51 {offsets = [80, 0], sizes = [16, 32], strides = [1, 1]} : vector<128x32xf32> to vector<16x32xf32>
    %cst_66 = arith.constant dense<0.000000e+00> : vector<16x32xf32>
    %72 = tpu.matmul %70, %71, %cst_66 {dimension_numbers = #tpu.dot_dimension_numbers<[1], [0], [0], [1], [0, 0, 1, 1], [], []>} : vector<16x16xf32>, vector<16x32xf32>, vector<16x32xf32> -> vector<16x32xf32>
    %c0_67 = arith.constant 0 : index
    %c0_68 = arith.constant 0 : index
    %73 = vector.load %arg4[%c0_67, %c0_68] : memref<16x16xf32, #tpu.memory_space<vmem>>, vector<16x16xf32>
    %74 = vector.extract_strided_slice %51 {offsets = [96, 0], sizes = [16, 32], strides = [1, 1]} : vector<128x32xf32> to vector<16x32xf32>
    %cst_69 = arith.constant dense<0.000000e+00> : vector<16x32xf32>
    %75 = tpu.matmul %73, %74, %cst_69 {dimension_numbers = #tpu.dot_dimension_numbers<[1], [0], [0], [1], [0, 0, 1, 1], [], []>} : vector<16x16xf32>, vector<16x32xf32>, vector<16x32xf32> -> vector<16x32xf32>
    %c1_70 = arith.constant 1 : index
    %c0_71 = arith.constant 0 : index
    %c0_72 = arith.constant 0 : index
    %76 = vector.load %arg5[%c1_70, %c0_71, %c0_72] : memref<2x16x16xf32, #tpu.memory_space<vmem>>, vector<1x16x16xf32>
    %77 = vector.shape_cast %76 : vector<1x16x16xf32> to vector<16x16xf32>
    %78 = vector.extract_strided_slice %51 {offsets = [112, 0], sizes = [16, 32], strides = [1, 1]} : vector<128x32xf32> to vector<16x32xf32>
    %cst_73 = arith.constant dense<0.000000e+00> : vector<16x32xf32>
    %79 = tpu.matmul %77, %78, %cst_73 {dimension_numbers = #tpu.dot_dimension_numbers<[1], [0], [0], [1], [0, 0, 1, 1], [], []>} : vector<16x16xf32>, vector<16x32xf32>, vector<16x32xf32> -> vector<16x32xf32>
    %80 = tpu.concatenate %54, %58, %61, %65, %68, %72, %75, %79 in 0 : vector<16x32xf32>, vector<16x32xf32>, vector<16x32xf32>, vector<16x32xf32>, vector<16x32xf32>, vector<16x32xf32>, vector<16x32xf32>, vector<16x32xf32> -> vector<128x32xf32>
    %cst_74 = arith.constant 0.000000e+00 : f32
    %81 = vector.broadcast %cst_74 : f32 to vector<128x32xf32>
    %82 = arith.maximumf %80, %81 : vector<128x32xf32>
    %c1_75 = arith.constant 1 : index
    %c0_76 = arith.constant 0 : index
    %c0_77 = arith.constant 0 : index
    %83 = vector.load %arg6[%c1_75, %c0_76, %c0_77] : memref<2x32x32xf32, #tpu.memory_space<vmem>>, vector<1x32x32xf32>
    %84 = vector.shape_cast %83 : vector<1x32x32xf32> to vector<32x32xf32>
    %c1_78 = arith.constant 1 : index
    %c0_79 = arith.constant 0 : index
    %c0_80 = arith.constant 0 : index
    %85 = vector.load %arg7[%c1_78, %c0_79, %c0_80] : memref<2x1x32xf32, #tpu.memory_space<vmem>>, vector<1x1x32xf32>
    %86 = vector.shape_cast %85 : vector<1x1x32xf32> to vector<1x32xf32>
    %cst_81 = arith.constant dense<0.000000e+00> : vector<128x32xf32>
    %87 = tpu.matmul %82, %84, %cst_81 {dimension_numbers = #tpu.dot_dimension_numbers<[1], [0], [0], [1], [0, 0, 1, 1], [], []>} : vector<128x32xf32>, vector<32x32xf32>, vector<128x32xf32> -> vector<128x32xf32>
    %88 = vector.broadcast %86 : vector<1x32xf32> to vector<128x32xf32>
    %89 = arith.addf %87, %88 : vector<128x32xf32>
    %c0_82 = arith.constant 0 : index
    %c0_83 = arith.constant 0 : index
    %90 = vector.load %arg4[%c0_82, %c0_83] : memref<16x16xf32, #tpu.memory_space<vmem>>, vector<16x16xf32>
    %91 = vector.extract_strided_slice %89 {offsets = [0, 0], sizes = [16, 32], strides = [1, 1]} : vector<128x32xf32> to vector<16x32xf32>
    %cst_84 = arith.constant dense<0.000000e+00> : vector<16x32xf32>
    %92 = tpu.matmul %90, %91, %cst_84 {dimension_numbers = #tpu.dot_dimension_numbers<[1], [0], [0], [1], [0, 0, 1, 1], [], []>} : vector<16x16xf32>, vector<16x32xf32>, vector<16x32xf32> -> vector<16x32xf32>
    %c0_85 = arith.constant 0 : index
    %c0_86 = arith.constant 0 : index
    %c0_87 = arith.constant 0 : index
    %93 = vector.load %arg5[%c0_85, %c0_86, %c0_87] : memref<2x16x16xf32, #tpu.memory_space<vmem>>, vector<1x16x16xf32>
    %94 = vector.shape_cast %93 : vector<1x16x16xf32> to vector<16x16xf32>
    %95 = vector.extract_strided_slice %89 {offsets = [16, 0], sizes = [16, 32], strides = [1, 1]} : vector<128x32xf32> to vector<16x32xf32>
    %cst_88 = arith.constant dense<0.000000e+00> : vector<16x32xf32>
    %96 = tpu.matmul %94, %95, %cst_88 {dimension_numbers = #tpu.dot_dimension_numbers<[1], [0], [0], [1], [0, 0, 1, 1], [], []>} : vector<16x16xf32>, vector<16x32xf32>, vector<16x32xf32> -> vector<16x32xf32>
    %c0_89 = arith.constant 0 : index
    %c0_90 = arith.constant 0 : index
    %97 = vector.load %arg4[%c0_89, %c0_90] : memref<16x16xf32, #tpu.memory_space<vmem>>, vector<16x16xf32>
    %98 = vector.extract_strided_slice %89 {offsets = [32, 0], sizes = [16, 32], strides = [1, 1]} : vector<128x32xf32> to vector<16x32xf32>
    %cst_91 = arith.constant dense<0.000000e+00> : vector<16x32xf32>
    %99 = tpu.matmul %97, %98, %cst_91 {dimension_numbers = #tpu.dot_dimension_numbers<[1], [0], [0], [1], [0, 0, 1, 1], [], []>} : vector<16x16xf32>, vector<16x32xf32>, vector<16x32xf32> -> vector<16x32xf32>
    %c0_92 = arith.constant 0 : index
    %c0_93 = arith.constant 0 : index
    %c0_94 = arith.constant 0 : index
    %100 = vector.load %arg5[%c0_92, %c0_93, %c0_94] : memref<2x16x16xf32, #tpu.memory_space<vmem>>, vector<1x16x16xf32>
    %101 = vector.shape_cast %100 : vector<1x16x16xf32> to vector<16x16xf32>
    %102 = vector.extract_strided_slice %89 {offsets = [48, 0], sizes = [16, 32], strides = [1, 1]} : vector<128x32xf32> to vector<16x32xf32>
    %cst_95 = arith.constant dense<0.000000e+00> : vector<16x32xf32>
    %103 = tpu.matmul %101, %102, %cst_95 {dimension_numbers = #tpu.dot_dimension_numbers<[1], [0], [0], [1], [0, 0, 1, 1], [], []>} : vector<16x16xf32>, vector<16x32xf32>, vector<16x32xf32> -> vector<16x32xf32>
    %c0_96 = arith.constant 0 : index
    %c0_97 = arith.constant 0 : index
    %104 = vector.load %arg4[%c0_96, %c0_97] : memref<16x16xf32, #tpu.memory_space<vmem>>, vector<16x16xf32>
    %105 = vector.extract_strided_slice %89 {offsets = [64, 0], sizes = [16, 32], strides = [1, 1]} : vector<128x32xf32> to vector<16x32xf32>
    %cst_98 = arith.constant dense<0.000000e+00> : vector<16x32xf32>
    %106 = tpu.matmul %104, %105, %cst_98 {dimension_numbers = #tpu.dot_dimension_numbers<[1], [0], [0], [1], [0, 0, 1, 1], [], []>} : vector<16x16xf32>, vector<16x32xf32>, vector<16x32xf32> -> vector<16x32xf32>
    %c1_99 = arith.constant 1 : index
    %c0_100 = arith.constant 0 : index
    %c0_101 = arith.constant 0 : index
    %107 = vector.load %arg5[%c1_99, %c0_100, %c0_101] : memref<2x16x16xf32, #tpu.memory_space<vmem>>, vector<1x16x16xf32>
    %108 = vector.shape_cast %107 : vector<1x16x16xf32> to vector<16x16xf32>
    %109 = vector.extract_strided_slice %89 {offsets = [80, 0], sizes = [16, 32], strides = [1, 1]} : vector<128x32xf32> to vector<16x32xf32>
    %cst_102 = arith.constant dense<0.000000e+00> : vector<16x32xf32>
    %110 = tpu.matmul %108, %109, %cst_102 {dimension_numbers = #tpu.dot_dimension_numbers<[1], [0], [0], [1], [0, 0, 1, 1], [], []>} : vector<16x16xf32>, vector<16x32xf32>, vector<16x32xf32> -> vector<16x32xf32>
    %c0_103 = arith.constant 0 : index
    %c0_104 = arith.constant 0 : index
    %111 = vector.load %arg4[%c0_103, %c0_104] : memref<16x16xf32, #tpu.memory_space<vmem>>, vector<16x16xf32>
    %112 = vector.extract_strided_slice %89 {offsets = [96, 0], sizes = [16, 32], strides = [1, 1]} : vector<128x32xf32> to vector<16x32xf32>
    %cst_105 = arith.constant dense<0.000000e+00> : vector<16x32xf32>
    %113 = tpu.matmul %111, %112, %cst_105 {dimension_numbers = #tpu.dot_dimension_numbers<[1], [0], [0], [1], [0, 0, 1, 1], [], []>} : vector<16x16xf32>, vector<16x32xf32>, vector<16x32xf32> -> vector<16x32xf32>
    %c1_106 = arith.constant 1 : index
    %c0_107 = arith.constant 0 : index
    %c0_108 = arith.constant 0 : index
    %114 = vector.load %arg5[%c1_106, %c0_107, %c0_108] : memref<2x16x16xf32, #tpu.memory_space<vmem>>, vector<1x16x16xf32>
    %115 = vector.shape_cast %114 : vector<1x16x16xf32> to vector<16x16xf32>
    %116 = vector.extract_strided_slice %89 {offsets = [112, 0], sizes = [16, 32], strides = [1, 1]} : vector<128x32xf32> to vector<16x32xf32>
    %cst_109 = arith.constant dense<0.000000e+00> : vector<16x32xf32>
    %117 = tpu.matmul %115, %116, %cst_109 {dimension_numbers = #tpu.dot_dimension_numbers<[1], [0], [0], [1], [0, 0, 1, 1], [], []>} : vector<16x16xf32>, vector<16x32xf32>, vector<16x32xf32> -> vector<16x32xf32>
    %118 = tpu.concatenate %92, %96, %99, %103, %106, %110, %113, %117 in 0 : vector<16x32xf32>, vector<16x32xf32>, vector<16x32xf32>, vector<16x32xf32>, vector<16x32xf32>, vector<16x32xf32>, vector<16x32xf32>, vector<16x32xf32> -> vector<128x32xf32>
    %cst_110 = arith.constant 0.000000e+00 : f32
    %119 = vector.broadcast %cst_110 : f32 to vector<128x32xf32>
    %120 = arith.maximumf %118, %119 : vector<128x32xf32>
    %121 = vector.extract_strided_slice %120 {offsets = [0, 0], sizes = [16, 32], strides = [1, 1]} : vector<128x32xf32> to vector<16x32xf32>
    %cst_111 = arith.constant 0.000000e+00 : f32
    %122 = vector.broadcast %cst_111 : f32 to vector<16x32xf32>
    %123 = arith.addf %122, %121 : vector<16x32xf32>
    %124 = vector.extract_strided_slice %120 {offsets = [32, 0], sizes = [16, 32], strides = [1, 1]} : vector<128x32xf32> to vector<16x32xf32>
    %125 = arith.addf %123, %124 : vector<16x32xf32>
    %cst_112 = arith.constant 5.000000e-01 : f32
    %126 = vector.broadcast %cst_112 : f32 to vector<16x32xf32>
    %127 = arith.mulf %125, %126 : vector<16x32xf32>
    %128 = vector.extract_strided_slice %120 {offsets = [16, 0], sizes = [16, 32], strides = [1, 1]} : vector<128x32xf32> to vector<16x32xf32>
    %cst_113 = arith.constant 0.000000e+00 : f32
    %129 = vector.broadcast %cst_113 : f32 to vector<16x32xf32>
    %130 = arith.addf %129, %128 : vector<16x32xf32>
    %131 = vector.extract_strided_slice %120 {offsets = [48, 0], sizes = [16, 32], strides = [1, 1]} : vector<128x32xf32> to vector<16x32xf32>
    %132 = arith.addf %130, %131 : vector<16x32xf32>
    %cst_114 = arith.constant 5.000000e-01 : f32
    %133 = vector.broadcast %cst_114 : f32 to vector<16x32xf32>
    %134 = arith.mulf %132, %133 : vector<16x32xf32>
    %135 = vector.extract_strided_slice %120 {offsets = [64, 0], sizes = [16, 32], strides = [1, 1]} : vector<128x32xf32> to vector<16x32xf32>
    %cst_115 = arith.constant 0.000000e+00 : f32
    %136 = vector.broadcast %cst_115 : f32 to vector<16x32xf32>
    %137 = arith.addf %136, %135 : vector<16x32xf32>
    %138 = vector.extract_strided_slice %120 {offsets = [96, 0], sizes = [16, 32], strides = [1, 1]} : vector<128x32xf32> to vector<16x32xf32>
    %139 = arith.addf %137, %138 : vector<16x32xf32>
    %cst_116 = arith.constant 5.000000e-01 : f32
    %140 = vector.broadcast %cst_116 : f32 to vector<16x32xf32>
    %141 = arith.mulf %139, %140 : vector<16x32xf32>
    %142 = vector.extract_strided_slice %120 {offsets = [80, 0], sizes = [16, 32], strides = [1, 1]} : vector<128x32xf32> to vector<16x32xf32>
    %cst_117 = arith.constant 0.000000e+00 : f32
    %143 = vector.broadcast %cst_117 : f32 to vector<16x32xf32>
    %144 = arith.addf %143, %142 : vector<16x32xf32>
    %145 = vector.extract_strided_slice %120 {offsets = [112, 0], sizes = [16, 32], strides = [1, 1]} : vector<128x32xf32> to vector<16x32xf32>
    %146 = arith.addf %144, %145 : vector<16x32xf32>
    %cst_118 = arith.constant 5.000000e-01 : f32
    %147 = vector.broadcast %cst_118 : f32 to vector<16x32xf32>
    %148 = arith.mulf %146, %147 : vector<16x32xf32>
    %149 = arith.addf %127, %134 : vector<16x32xf32>
    %cst_119 = arith.constant 5.000000e-01 : f32
    %150 = vector.broadcast %cst_119 : f32 to vector<16x32xf32>
    %151 = arith.mulf %150, %149 : vector<16x32xf32>
    %152 = arith.addf %141, %148 : vector<16x32xf32>
    %cst_120 = arith.constant 5.000000e-01 : f32
    %153 = vector.broadcast %cst_120 : f32 to vector<16x32xf32>
    %154 = arith.mulf %153, %152 : vector<16x32xf32>
    %c0_121 = arith.constant 0 : index
    %c0_122 = arith.constant 0 : index
    %155 = vector.load %arg8[%c0_121, %c0_122] : memref<32x32xf32, #tpu.memory_space<vmem>>, vector<32x32xf32>
    %c0_123 = arith.constant 0 : index
    %c0_124 = arith.constant 0 : index
    %156 = vector.load %arg9[%c0_123, %c0_124] : memref<1x32xf32, #tpu.memory_space<vmem>>, vector<1x32xf32>
    %c0_125 = arith.constant 0 : index
    %c0_126 = arith.constant 0 : index
    %157 = vector.load %arg10[%c0_125, %c0_126] : memref<1x32xf32, #tpu.memory_space<vmem>>, vector<1x32xf32>
    %cst_127 = arith.constant dense<0.000000e+00> : vector<16x32xf32>
    %158 = tpu.matmul %151, %155, %cst_127 {dimension_numbers = #tpu.dot_dimension_numbers<[1], [0], [0], [1], [0, 0, 1, 1], [], []>} : vector<16x32xf32>, vector<32x32xf32>, vector<16x32xf32> -> vector<16x32xf32>
    %159 = vector.broadcast %156 : vector<1x32xf32> to vector<16x32xf32>
    %160 = arith.addf %158, %159 : vector<16x32xf32>
    %161 = math.tanh %160 : vector<16x32xf32>
    %cst_128 = arith.constant dense<0.000000e+00> : vector<32xf32>
    %162 = vector.multi_reduction <add>, %161, %cst_128 [0] : vector<16x32xf32> to vector<32xf32>
    %163 = vector.shape_cast %162 : vector<32xf32> to vector<1x32xf32>
    %cst_129 = arith.constant 1.600000e+01 : f32
    %164 = vector.broadcast %cst_129 : f32 to vector<1x32xf32>
    %165 = arith.divf %163, %164 : vector<1x32xf32>
    %166 = arith.mulf %165, %157 : vector<1x32xf32>
    %cst_130 = arith.constant dense<0.000000e+00> : vector<1xf32>
    %167 = vector.multi_reduction <add>, %166, %cst_130 [1] : vector<1x32xf32> to vector<1xf32>
    %168 = vector.shape_cast %167 : vector<1xf32> to vector<1x1xf32>
    %cst_131 = arith.constant dense<0.000000e+00> : vector<16x32xf32>
    %169 = tpu.matmul %154, %155, %cst_131 {dimension_numbers = #tpu.dot_dimension_numbers<[1], [0], [0], [1], [0, 0, 1, 1], [], []>} : vector<16x32xf32>, vector<32x32xf32>, vector<16x32xf32> -> vector<16x32xf32>
    %170 = vector.broadcast %156 : vector<1x32xf32> to vector<16x32xf32>
    %171 = arith.addf %169, %170 : vector<16x32xf32>
    %172 = math.tanh %171 : vector<16x32xf32>
    %cst_132 = arith.constant dense<0.000000e+00> : vector<32xf32>
    %173 = vector.multi_reduction <add>, %172, %cst_132 [0] : vector<16x32xf32> to vector<32xf32>
    %174 = vector.shape_cast %173 : vector<32xf32> to vector<1x32xf32>
    %cst_133 = arith.constant 1.600000e+01 : f32
    %175 = vector.broadcast %cst_133 : f32 to vector<1x32xf32>
    %176 = arith.divf %174, %175 : vector<1x32xf32>
    %177 = arith.mulf %176, %157 : vector<1x32xf32>
    %cst_134 = arith.constant dense<0.000000e+00> : vector<1xf32>
    %178 = vector.multi_reduction <add>, %177, %cst_134 [1] : vector<1x32xf32> to vector<1xf32>
    %179 = vector.shape_cast %178 : vector<1xf32> to vector<1x1xf32>
    %180 = arith.maximumf %168, %179 : vector<1x1xf32>
    %181 = arith.subf %168, %180 : vector<1x1xf32>
    %182 = math.exp %181 : vector<1x1xf32>
    %183 = arith.subf %179, %180 : vector<1x1xf32>
    %184 = math.exp %183 : vector<1x1xf32>
    %185 = arith.addf %182, %184 : vector<1x1xf32>
    %cst_135 = arith.constant 1.000000e+00 : f32
    %186 = vector.broadcast %cst_135 : f32 to vector<1x1xf32>
    %187 = arith.divf %186, %185 : vector<1x1xf32>
    %188 = arith.mulf %182, %187 : vector<1x1xf32>
    %189 = vector.broadcast %188 : vector<1x1xf32> to vector<16x32xf32>
    %190 = arith.mulf %189, %151 : vector<16x32xf32>
    %191 = arith.mulf %184, %187 : vector<1x1xf32>
    %192 = vector.broadcast %191 : vector<1x1xf32> to vector<16x32xf32>
    %193 = arith.mulf %192, %154 : vector<16x32xf32>
    %194 = arith.addf %190, %193 : vector<16x32xf32>
    %195 = vector.extract_strided_slice %120 {offsets = [0, 0], sizes = [16, 32], strides = [1, 1]} : vector<128x32xf32> to vector<16x32xf32>
    %196 = vector.extract_strided_slice %120 {offsets = [32, 0], sizes = [16, 32], strides = [1, 1]} : vector<128x32xf32> to vector<16x32xf32>
    %197 = vector.extract_strided_slice %120 {offsets = [64, 0], sizes = [16, 32], strides = [1, 1]} : vector<128x32xf32> to vector<16x32xf32>
    %198 = vector.extract_strided_slice %120 {offsets = [96, 0], sizes = [16, 32], strides = [1, 1]} : vector<128x32xf32> to vector<16x32xf32>
    %199 = tpu.concatenate %195, %196, %197, %198 in 0 : vector<16x32xf32>, vector<16x32xf32>, vector<16x32xf32>, vector<16x32xf32> -> vector<64x32xf32>
    %200 = vector.extract_strided_slice %120 {offsets = [16, 0], sizes = [16, 32], strides = [1, 1]} : vector<128x32xf32> to vector<16x32xf32>
    %201 = vector.extract_strided_slice %120 {offsets = [48, 0], sizes = [16, 32], strides = [1, 1]} : vector<128x32xf32> to vector<16x32xf32>
    %202 = vector.extract_strided_slice %120 {offsets = [80, 0], sizes = [16, 32], strides = [1, 1]} : vector<128x32xf32> to vector<16x32xf32>
    %203 = vector.extract_strided_slice %120 {offsets = [112, 0], sizes = [16, 32], strides = [1, 1]} : vector<128x32xf32> to vector<16x32xf32>
    %204 = tpu.concatenate %200, %201, %202, %203 in 0 : vector<16x32xf32>, vector<16x32xf32>, vector<16x32xf32>, vector<16x32xf32> -> vector<64x32xf32>
    %c0_136 = arith.constant 0 : index
    %c0_137 = arith.constant 0 : index
    %205 = vector.load %arg11[%c0_136, %c0_137] : memref<64x32xf32, #tpu.memory_space<vmem>>, vector<64x32xf32>
    %206 = vector.extract_strided_slice %205 {offsets = [0, 0], sizes = [32, 32], strides = [1, 1]} : vector<64x32xf32> to vector<32x32xf32>
    %cst_138 = arith.constant dense<0.000000e+00> : vector<64x32xf32>
    %207 = tpu.matmul %199, %206, %cst_138 {dimension_numbers = #tpu.dot_dimension_numbers<[1], [0], [0], [1], [0, 0, 1, 1], [], []>} : vector<64x32xf32>, vector<32x32xf32>, vector<64x32xf32> -> vector<64x32xf32>
    %208 = vector.extract_strided_slice %205 {offsets = [32, 0], sizes = [32, 32], strides = [1, 1]} : vector<64x32xf32> to vector<32x32xf32>
    %cst_139 = arith.constant dense<0.000000e+00> : vector<64x32xf32>
    %209 = tpu.matmul %204, %208, %cst_139 {dimension_numbers = #tpu.dot_dimension_numbers<[1], [0], [0], [1], [0, 0, 1, 1], [], []>} : vector<64x32xf32>, vector<32x32xf32>, vector<64x32xf32> -> vector<64x32xf32>
    %210 = arith.addf %207, %209 : vector<64x32xf32>
    %c0_140 = arith.constant 0 : index
    %c0_141 = arith.constant 0 : index
    %211 = vector.load %arg12[%c0_140, %c0_141] : memref<1x32xf32, #tpu.memory_space<vmem>>, vector<1x32xf32>
    %212 = vector.broadcast %211 : vector<1x32xf32> to vector<64x32xf32>
    %213 = arith.addf %210, %212 : vector<64x32xf32>
    %cst_142 = arith.constant 0.000000e+00 : f32
    %214 = vector.broadcast %cst_142 : f32 to vector<64x32xf32>
    %215 = arith.cmpf ogt, %213, %214 : vector<64x32xf32>
    %cst_143 = arith.constant 0.000000e+00 : f32
    %216 = vector.broadcast %cst_143 : f32 to vector<64x32xf32>
    %217 = arith.minimumf %213, %216 : vector<64x32xf32>
    %218 = math.exp %217 : vector<64x32xf32>
    %cst_144 = arith.constant 1.000000e+00 : f32
    %219 = vector.broadcast %cst_144 : f32 to vector<64x32xf32>
    %220 = arith.subf %218, %219 : vector<64x32xf32>
    %221 = arith.select %215, %213, %220 : vector<64x32xi1>, vector<64x32xf32>
    %c0_145 = arith.constant 0 : index
    %c0_146 = arith.constant 0 : index
    %222 = vector.load %arg13[%c0_145, %c0_146] : memref<32x32xf32, #tpu.memory_space<vmem>>, vector<32x32xf32>
    %cst_147 = arith.constant dense<0.000000e+00> : vector<64x32xf32>
    %223 = tpu.matmul %221, %222, %cst_147 {dimension_numbers = #tpu.dot_dimension_numbers<[1], [0], [0], [1], [0, 0, 1, 1], [], []>} : vector<64x32xf32>, vector<32x32xf32>, vector<64x32xf32> -> vector<64x32xf32>
    %c0_148 = arith.constant 0 : index
    %c0_149 = arith.constant 0 : index
    %224 = vector.load %arg14[%c0_148, %c0_149] : memref<1x32xf32, #tpu.memory_space<vmem>>, vector<1x32xf32>
    %225 = vector.broadcast %224 : vector<1x32xf32> to vector<64x32xf32>
    %226 = arith.addf %223, %225 : vector<64x32xf32>
    %c0_150 = arith.constant 0 : index
    %c0_151 = arith.constant 0 : index
    %c0_152 = arith.constant 0 : index
    %227 = vector.load %arg1[%c0_150, %c0_151, %c0_152] : memref<4x16x32xf32, #tpu.memory_space<vmem>>, vector<1x16x32xf32>
    %228 = vector.shape_cast %227 : vector<1x16x32xf32> to vector<16x32xf32>
    %c1_153 = arith.constant 1 : index
    %c0_154 = arith.constant 0 : index
    %c0_155 = arith.constant 0 : index
    %229 = vector.load %arg1[%c1_153, %c0_154, %c0_155] : memref<4x16x32xf32, #tpu.memory_space<vmem>>, vector<1x16x32xf32>
    %230 = vector.shape_cast %229 : vector<1x16x32xf32> to vector<16x32xf32>
    %c2_156 = arith.constant 2 : index
    %c0_157 = arith.constant 0 : index
    %c0_158 = arith.constant 0 : index
    %231 = vector.load %arg1[%c2_156, %c0_157, %c0_158] : memref<4x16x32xf32, #tpu.memory_space<vmem>>, vector<1x16x32xf32>
    %232 = vector.shape_cast %231 : vector<1x16x32xf32> to vector<16x32xf32>
    %c3_159 = arith.constant 3 : index
    %c0_160 = arith.constant 0 : index
    %c0_161 = arith.constant 0 : index
    %233 = vector.load %arg1[%c3_159, %c0_160, %c0_161] : memref<4x16x32xf32, #tpu.memory_space<vmem>>, vector<1x16x32xf32>
    %234 = vector.shape_cast %233 : vector<1x16x32xf32> to vector<16x32xf32>
    %235 = tpu.concatenate %228, %230, %232, %234 in 0 : vector<16x32xf32>, vector<16x32xf32>, vector<16x32xf32>, vector<16x32xf32> -> vector<64x32xf32>
    %236 = arith.mulf %226, %226 : vector<64x32xf32>
    %cst_162 = arith.constant dense<0.000000e+00> : vector<64xf32>
    %237 = vector.multi_reduction <add>, %236, %cst_162 [1] : vector<64x32xf32> to vector<64xf32>
    %238 = vector.shape_cast %237 : vector<64xf32> to vector<64x1xf32>
    %cst_163 = arith.constant 9.99999996E-13 : f32
    %239 = vector.broadcast %cst_163 : f32 to vector<64x1xf32>
    %240 = arith.addf %238, %239 : vector<64x1xf32>
    %241 = math.rsqrt %240 : vector<64x1xf32>
    %242 = vector.broadcast %241 : vector<64x1xf32> to vector<64x32xf32>
    %243 = arith.mulf %226, %242 : vector<64x32xf32>
    %244 = arith.mulf %235, %235 : vector<64x32xf32>
    %cst_164 = arith.constant dense<0.000000e+00> : vector<64xf32>
    %245 = vector.multi_reduction <add>, %244, %cst_164 [1] : vector<64x32xf32> to vector<64xf32>
    %246 = vector.shape_cast %245 : vector<64xf32> to vector<64x1xf32>
    %cst_165 = arith.constant 9.99999996E-13 : f32
    %247 = vector.broadcast %cst_165 : f32 to vector<64x1xf32>
    %248 = arith.addf %246, %247 : vector<64x1xf32>
    %249 = math.rsqrt %248 : vector<64x1xf32>
    %250 = vector.broadcast %249 : vector<64x1xf32> to vector<64x32xf32>
    %251 = arith.mulf %235, %250 : vector<64x32xf32>
    %252 = arith.mulf %243, %251 : vector<64x32xf32>
    %cst_166 = arith.constant dense<0.000000e+00> : vector<64xf32>
    %253 = vector.multi_reduction <add>, %252, %cst_166 [1] : vector<64x32xf32> to vector<64xf32>
    %254 = vector.shape_cast %253 : vector<64xf32> to vector<64x1xf32>
    %cst_167 = arith.constant 1.000000e+00 : f32
    %255 = vector.broadcast %cst_167 : f32 to vector<64x1xf32>
    %256 = arith.subf %255, %254 : vector<64x1xf32>
    %257 = arith.mulf %256, %256 : vector<64x1xf32>
    %258 = arith.mulf %257, %256 : vector<64x1xf32>
    %cst_168 = arith.constant dense<0.000000e+00> : vector<64xf32>
    %259 = vector.multi_reduction <add>, %258, %cst_168 [1] : vector<64x1xf32> to vector<64xf32>
    %260 = vector.shape_cast %259 : vector<64xf32> to vector<64x1xf32>
    %cst_169 = arith.constant dense<0.000000e+00> : vector<1xf32>
    %261 = vector.multi_reduction <add>, %260, %cst_169 [0] : vector<64x1xf32> to vector<1xf32>
    %262 = vector.shape_cast %261 : vector<1xf32> to vector<1x1xf32>
    %cst_170 = arith.constant 7.812500e-03 : f32
    %263 = vector.broadcast %cst_170 : f32 to vector<1x1xf32>
    %264 = arith.mulf %262, %263 : vector<1x1xf32>
    %265 = vector.extract_strided_slice %194 {offsets = [0, 0], sizes = [4, 32], strides = [1, 1]} : vector<16x32xf32> to vector<4x32xf32>
    %266 = arith.mulf %194, %194 : vector<16x32xf32>
    %cst_171 = arith.constant dense<0.000000e+00> : vector<16xf32>
    %267 = vector.multi_reduction <add>, %266, %cst_171 [1] : vector<16x32xf32> to vector<16xf32>
    %268 = vector.shape_cast %267 : vector<16xf32> to vector<16x1xf32>
    %cst_172 = arith.constant 1.000000e+00 : f32
    %269 = vector.broadcast %cst_172 : f32 to vector<1x32xf32>
    %270 = arith.mulf %265, %265 : vector<4x32xf32>
    %cst_173 = arith.constant dense<0.000000e+00> : vector<1x4xf32>
    %271 = tpu.matmul %269, %270, %cst_173 {dimension_numbers = #tpu.dot_dimension_numbers<[1], [1], [0], [0], [0, 0, 1, 0], [], []>} : vector<1x32xf32>, vector<4x32xf32>, vector<1x4xf32> -> vector<1x4xf32>
    %cst_174 = arith.constant dense<0.000000e+00> : vector<16x4xf32>
    %272 = tpu.matmul %194, %265, %cst_174 {dimension_numbers = #tpu.dot_dimension_numbers<[1], [1], [0], [0], [0, 0, 1, 0], [], []>} : vector<16x32xf32>, vector<4x32xf32>, vector<16x4xf32> -> vector<16x4xf32>
    %273 = vector.broadcast %268 : vector<16x1xf32> to vector<16x4xf32>
    %274 = vector.broadcast %271 : vector<1x4xf32> to vector<16x4xf32>
    %275 = arith.addf %273, %274 : vector<16x4xf32>
    %cst_175 = arith.constant 2.000000e+00 : f32
    %276 = vector.broadcast %cst_175 : f32 to vector<16x4xf32>
    %277 = arith.mulf %276, %272 : vector<16x4xf32>
    %278 = arith.subf %275, %277 : vector<16x4xf32>
    %cst_176 = arith.constant 0.000000e+00 : f32
    %279 = vector.broadcast %cst_176 : f32 to vector<16x4xf32>
    %280 = arith.maximumf %278, %279 : vector<16x4xf32>
    %cst_177 = arith.constant 1.000000e+00 : f32
    %281 = vector.broadcast %cst_177 : f32 to vector<16x4xf32>
    %282 = arith.addf %281, %280 : vector<16x4xf32>
    %cst_178 = arith.constant 1.000000e+00 : f32
    %283 = vector.broadcast %cst_178 : f32 to vector<16x4xf32>
    %284 = arith.divf %283, %282 : vector<16x4xf32>
    %cst_179 = arith.constant dense<0.000000e+00> : vector<16xf32>
    %285 = vector.multi_reduction <add>, %284, %cst_179 [1] : vector<16x4xf32> to vector<16xf32>
    %286 = vector.shape_cast %285 : vector<16xf32> to vector<16x1xf32>
    %cst_180 = arith.constant 9.99999993E-9 : f32
    %287 = vector.broadcast %cst_180 : f32 to vector<16x1xf32>
    %288 = arith.addf %286, %287 : vector<16x1xf32>
    %289 = vector.broadcast %288 : vector<16x1xf32> to vector<16x4xf32>
    %290 = arith.divf %284, %289 : vector<16x4xf32>
    %cst_181 = arith.constant dense<0.000000e+00> : vector<4xf32>
    %291 = vector.multi_reduction <add>, %290, %cst_181 [0] : vector<16x4xf32> to vector<4xf32>
    %292 = vector.shape_cast %291 : vector<4xf32> to vector<1x4xf32>
    %293 = arith.mulf %290, %290 : vector<16x4xf32>
    %cst_182 = arith.constant 9.99999993E-9 : f32
    %294 = vector.broadcast %cst_182 : f32 to vector<1x4xf32>
    %295 = arith.addf %292, %294 : vector<1x4xf32>
    %296 = vector.broadcast %295 : vector<1x4xf32> to vector<16x4xf32>
    %297 = arith.divf %293, %296 : vector<16x4xf32>
    %cst_183 = arith.constant dense<0.000000e+00> : vector<16xf32>
    %298 = vector.multi_reduction <add>, %297, %cst_183 [1] : vector<16x4xf32> to vector<16xf32>
    %299 = vector.shape_cast %298 : vector<16xf32> to vector<16x1xf32>
    %cst_184 = arith.constant 9.99999993E-9 : f32
    %300 = vector.broadcast %cst_184 : f32 to vector<16x1xf32>
    %301 = arith.addf %299, %300 : vector<16x1xf32>
    %302 = vector.broadcast %301 : vector<16x1xf32> to vector<16x4xf32>
    %303 = arith.divf %297, %302 : vector<16x4xf32>
    %cst_185 = arith.constant 9.99999993E-9 : f32
    %304 = vector.broadcast %cst_185 : f32 to vector<16x4xf32>
    %305 = arith.addf %303, %304 : vector<16x4xf32>
    %306 = math.log %305 : vector<16x4xf32>
    %cst_186 = arith.constant 9.99999993E-9 : f32
    %307 = vector.broadcast %cst_186 : f32 to vector<16x4xf32>
    %308 = arith.addf %290, %307 : vector<16x4xf32>
    %309 = math.log %308 : vector<16x4xf32>
    %310 = arith.subf %306, %309 : vector<16x4xf32>
    %311 = arith.mulf %303, %310 : vector<16x4xf32>
    %cst_187 = arith.constant dense<0.000000e+00> : vector<16xf32>
    %312 = vector.multi_reduction <add>, %311, %cst_187 [1] : vector<16x4xf32> to vector<16xf32>
    %313 = vector.shape_cast %312 : vector<16xf32> to vector<16x1xf32>
    %cst_188 = arith.constant dense<0.000000e+00> : vector<1xf32>
    %314 = vector.multi_reduction <add>, %313, %cst_188 [0] : vector<16x1xf32> to vector<1xf32>
    %315 = vector.shape_cast %314 : vector<1xf32> to vector<1x1xf32>
    %cst_189 = arith.constant 6.250000e-02 : f32
    %316 = vector.broadcast %cst_189 : f32 to vector<1x1xf32>
    %317 = arith.mulf %315, %316 : vector<1x1xf32>
    %318 = arith.addf %264, %317 : vector<1x1xf32>
    %c0_190 = arith.constant 0 : index
    %c0_191 = arith.constant 0 : index
    %319 = vector.load %arg15[%c0_190, %c0_191] : memref<1x1xf32, #tpu.memory_space<vmem>>, vector<1x1xf32>
    tpu.vector_store %arg15[%c0_190, %c0_191], %318 {strides = array<i32>} : memref<1x1xf32, #tpu.memory_space<vmem>>, vector<1x1xf32>,
    return
  }
  func.func @transform_0(%arg0: i32) -> (i32, i32, i32) {
    %c0_i32 = arith.constant 0 : i32
    %c0_i32_0 = arith.constant 0 : i32
    %c0_i32_1 = arith.constant 0 : i32
    %c0_i32_2 = arith.constant 0 : i32
    return %c0_i32, %c0_i32_0, %c0_i32_1 : i32, i32, i32
  }
  func.func @transform_1(%arg0: i32) -> (i32, i32, i32) {
    %c0_i32 = arith.constant 0 : i32
    %c0_i32_0 = arith.constant 0 : i32
    %c0_i32_1 = arith.constant 0 : i32
    %c0_i32_2 = arith.constant 0 : i32
    return %c0_i32, %c0_i32_0, %c0_i32_1 : i32, i32, i32
  }
  func.func @transform_2(%arg0: i32) -> (i32, i32, i32) {
    %c0_i32 = arith.constant 0 : i32
    %c0_i32_0 = arith.constant 0 : i32
    %c0_i32_1 = arith.constant 0 : i32
    %c0_i32_2 = arith.constant 0 : i32
    return %c0_i32, %c0_i32_0, %c0_i32_1 : i32, i32, i32
  }
  func.func @transform_3(%arg0: i32) -> (i32, i32) {
    %c0_i32 = arith.constant 0 : i32
    %c0_i32_0 = arith.constant 0 : i32
    %c0_i32_1 = arith.constant 0 : i32
    return %c0_i32, %c0_i32_0 : i32, i32
  }
  func.func @transform_4(%arg0: i32) -> (i32, i32, i32) {
    %c0_i32 = arith.constant 0 : i32
    %c0_i32_0 = arith.constant 0 : i32
    %c0_i32_1 = arith.constant 0 : i32
    %c0_i32_2 = arith.constant 0 : i32
    return %c0_i32, %c0_i32_0, %c0_i32_1 : i32, i32, i32
  }
  func.func @transform_5(%arg0: i32) -> (i32, i32, i32) {
    %c0_i32 = arith.constant 0 : i32
    %c0_i32_0 = arith.constant 0 : i32
    %c0_i32_1 = arith.constant 0 : i32
    %c0_i32_2 = arith.constant 0 : i32
    return %c0_i32, %c0_i32_0, %c0_i32_1 : i32, i32, i32
  }
  func.func @transform_6(%arg0: i32) -> (i32, i32, i32) {
    %c0_i32 = arith.constant 0 : i32
    %c0_i32_0 = arith.constant 0 : i32
    %c0_i32_1 = arith.constant 0 : i32
    %c0_i32_2 = arith.constant 0 : i32
    return %c0_i32, %c0_i32_0, %c0_i32_1 : i32, i32, i32
  }
  func.func @transform_7(%arg0: i32) -> (i32, i32) {
    %c0_i32 = arith.constant 0 : i32
    %c0_i32_0 = arith.constant 0 : i32
    %c0_i32_1 = arith.constant 0 : i32
    return %c0_i32, %c0_i32_0 : i32, i32
  }
  func.func @transform_8(%arg0: i32) -> (i32, i32) {
    %c0_i32 = arith.constant 0 : i32
    %c0_i32_0 = arith.constant 0 : i32
    %c0_i32_1 = arith.constant 0 : i32
    return %c0_i32, %c0_i32_0 : i32, i32
  }
  func.func @transform_9(%arg0: i32) -> (i32, i32) {
    %c0_i32 = arith.constant 0 : i32
    %c0_i32_0 = arith.constant 0 : i32
    %c0_i32_1 = arith.constant 0 : i32
    return %c0_i32, %c0_i32_0 : i32, i32
  }
  func.func @transform_10(%arg0: i32) -> (i32, i32) {
    %c0_i32 = arith.constant 0 : i32
    %c0_i32_0 = arith.constant 0 : i32
    %c0_i32_1 = arith.constant 0 : i32
    return %c0_i32, %c0_i32_0 : i32, i32
  }
  func.func @transform_11(%arg0: i32) -> (i32, i32) {
    %c0_i32 = arith.constant 0 : i32
    %c0_i32_0 = arith.constant 0 : i32
    %c0_i32_1 = arith.constant 0 : i32
    return %c0_i32, %c0_i32_0 : i32, i32
  }
  func.func @transform_12(%arg0: i32) -> (i32, i32) {
    %c0_i32 = arith.constant 0 : i32
    %c0_i32_0 = arith.constant 0 : i32
    %c0_i32_1 = arith.constant 0 : i32
    return %c0_i32, %c0_i32_0 : i32, i32
  }
  func.func @transform_13(%arg0: i32) -> (i32, i32) {
    %c0_i32 = arith.constant 0 : i32
    %c0_i32_0 = arith.constant 0 : i32
    %c0_i32_1 = arith.constant 0 : i32
    return %c0_i32, %c0_i32_0 : i32, i32
  }
  func.func @transform_14(%arg0: i32) -> (i32, i32) {
    %c0_i32 = arith.constant 0 : i32
    %c0_i32_0 = arith.constant 0 : i32
    %c0_i32_1 = arith.constant 0 : i32
    return %c0_i32, %c0_i32_0 : i32, i32
  }
}

</mosaic_0001>

<llo_original>
// kernel: model_forward.1
$region0: #{model_forward.1}
  #allocation0 [shape = 'u32[]', space=smem, size = 0x4, offset = 0x4, fixed_abs, tag = 'smem constant byte address 0x4 - core index']
  #allocation1 [shape = 'u32[72,128]{1,0:T(1,128)}', space=vmem, size = 0x9000, scoped, tag = 'internal scratch']
  %s0 = inlined_call_operand.vmem [shape: f32[4,16,32], index: 0, kind: input, shape index: {}]
  %s1 = inlined_call_operand.vmem [shape: f32[4,32,32], index: 1, kind: input, shape index: {}]
  %s2 = inlined_call_operand.vmem [shape: f32[4,1,32], index: 2, kind: input, shape index: {}]
  %s3 = inlined_call_operand.hbm [shape: f32[16,16], index: 3, kind: input, shape index: {}]
  %s4 = inlined_call_operand.vmem [shape: f32[2,16,16], index: 4, kind: input, shape index: {}]
  %s5 = inlined_call_operand.vmem [shape: f32[2,32,32], index: 5, kind: input, shape index: {}]
  %s6 = inlined_call_operand.vmem [shape: f32[2,1,32], index: 6, kind: input, shape index: {}]
  %s7 = inlined_call_operand.hbm [shape: f32[32,32], index: 7, kind: input, shape index: {}]
  %s8 = inlined_call_operand.hbm [shape: f32[1,32], index: 8, kind: input, shape index: {}]
  %s9 = inlined_call_operand.hbm [shape: f32[1,32], index: 9, kind: input, shape index: {}]
  %s10 = inlined_call_operand.vmem [shape: f32[64,32], index: 10, kind: input, shape index: {}]
  %s11 = inlined_call_operand.hbm [shape: f32[1,32], index: 11, kind: input, shape index: {}]
  %s12 = inlined_call_operand.hbm [shape: f32[32,32], index: 12, kind: input, shape index: {}]
  %s13 = inlined_call_operand.hbm [shape: f32[1,32], index: 13, kind: input, shape index: {}]
  %s14 = inlined_call_operand.hbm [shape: f32[1,1], index: 14, kind: output, shape index: {}]
  %s15 = sld [smem:[#allocation0]]
  $region94: #{model_forward.1} parent=0
    _
  %s17 = ssub.s32 1, %s15
  %s18 = scalar_select 0, %s17, %s15
  $region1: #{model_forward.1} parent=0
    #allocation2 [shape = 'u8[8192]{0}', space=vmem, size = 0x2000, scoped, tag = 'input window, operand 3, single buffered']
    #allocation3 [shape = 's32[1]{0}', space=sflag, size = 0x4, scoped, tag = 'scoped memory for model_forward.1']
    #allocation4 [shape = 's32[1]{0}', space=sflag, size = 0x4, scoped, tag = 'scoped memory for model_forward.1']
    #allocation5 [shape = 'u8[16384]{0}', space=vmem, size = 0x4000, scoped, tag = 'input window, operand 7, single buffered']
    #allocation6 [shape = 's32[1]{0}', space=sflag, size = 0x4, scoped, tag = 'scoped memory for model_forward.1']
    #allocation7 [shape = 'u8[512]{0}', space=vmem, size = 0x400, scoped, tag = 'input window, operand 8, single buffered']
    #allocation8 [shape = 'u8[512]{0}', space=vmem, size = 0x400, scoped, tag = 'input window, operand 9, single buffered']
    #allocation9 [shape = 's32[1]{0}', space=sflag, size = 0x4, scoped, tag = 'scoped memory for model_forward.1']
    #allocation10 [shape = 'u8[512]{0}', space=vmem, size = 0x400, scoped, tag = 'input window, operand 11, single buffered']
    #allocation11 [shape = 'u8[16384]{0}', space=vmem, size = 0x4000, scoped, tag = 'input window, operand 12, single buffered']
    #allocation12 [shape = 's32[1]{0}', space=sflag, size = 0x4, scoped, tag = 'scoped memory for model_forward.1']
    #allocation13 [shape = 'u8[512]{0}', space=vmem, size = 0x400, scoped, tag = 'input window, operand 13, single buffered']
    #allocation14 [shape = 'u8[512]{0}', space=vmem, size = 0x400, scoped, tag = 'output window, operand 0, single buffered']
    %19 = vsyncpa [#allocation3], 0
    %20 = vsyncpa [#allocation6], 0
    %21 = vsyncpa [#allocation9], 0
    %22 = vsyncpa [#allocation12], 0
    %23 = vsyncpa [#allocation4], 0
    // Predicated region
    $region2: #{model_forward.1} parent=1 // pred_check
      _
    $region3: #{model_forward.1} parent=1 // pred_check_branch
      %25 = sbr.rel (0) target = $region5
    $region4: #{model_forward.1} parent=1 // pred_region
      _
    $region5: #{model_forward.1} parent=1 // pred_fallthru
      _
    // Predicated region
    $region6: #{model_forward.1} parent=1 // pred_check
      _
    $region7: #{model_forward.1} parent=1 // pred_check_branch
      %27 = sbr.rel (0) target = $region9
    $region8: #{model_forward.1} parent=1 // pred_region
      _
    $region9: #{model_forward.1} parent=1 // pred_fallthru
      _
    // Predicated region
    $region10: #{model_forward.1} parent=1 // pred_check
      _
    $region11: #{model_forward.1} parent=1 // pred_check_branch
      %29 = sbr.rel (0) target = $region13
    $region12: #{model_forward.1} parent=1 // pred_region
      _
    $region13: #{model_forward.1} parent=1 // pred_fallthru
      _
    // Predicated region
    $region14: #{model_forward.1} parent=1 // pred_check
      _
    $region15: #{model_forward.1} parent=1 // pred_check_branch
      %31 = sbr.rel (0) target = $region17
    $region16: #{model_forward.1} parent=1 // pred_region
      %33 = vsyncadd [#allocation3], 0
      %s34 = sshll.u32 %s3, 4
      %s35 = int_to_ptr.hbm [resolvable:$true] %s34
      %s36 = sshll.u32 [#allocation2], 4
      %s37 = int_to_ptr.vmem [resolvable:$true] %s36
      %42 = dma.hbm_to_vmem [thread:$0]  %s35, 256, %s37, [#allocation3], 128, 128, 8
    $region17: #{model_forward.1} parent=1 // pred_fallthru
      _
    // Predicated region
    $region18: #{model_forward.1} parent=1 // pred_check
      _
    $region19: #{model_forward.1} parent=1 // pred_check_branch
      %44 = sbr.rel (0) target = $region21
    $region20: #{model_forward.1} parent=1 // pred_region
      _
    $region21: #{model_forward.1} parent=1 // pred_fallthru
      _
    // Predicated region
    $region22: #{model_forward.1} parent=1 // pred_check
      _
    $region23: #{model_forward.1} parent=1 // pred_check_branch
      %46 = sbr.rel (0) target = $region25
    $region24: #{model_forward.1} parent=1 // pred_region
      _
    $region25: #{model_forward.1} parent=1 // pred_fallthru
      _
    // Predicated region
    $region26: #{model_forward.1} parent=1 // pred_check
      _
    $region27: #{model_forward.1} parent=1 // pred_check_branch
      %48 = sbr.rel (0) target = $region29
    $region28: #{model_forward.1} parent=1 // pred_region
      _
    $region29: #{model_forward.1} parent=1 // pred_fallthru
      _
    // Predicated region
    $region30: #{model_forward.1} parent=1 // pred_check
      _
    $region31: #{model_forward.1} parent=1 // pred_check_branch
      %50 = sbr.rel (0) target = $region33
    $region32: #{model_forward.1} parent=1 // pred_region
      %52 = vsyncadd [#allocation6], 0
      %s53 = sshll.u32 %s7, 4
      %s54 = int_to_ptr.hbm [resolvable:$true] %s53
      %s55 = sshll.u32 [#allocation5], 4
      %s56 = int_to_ptr.vmem [resolvable:$true] %s55
      %61 = dma.hbm_to_vmem [thread:$0]  %s54, 512, %s56, [#allocation6], 128, 128, 8
    $region33: #{model_forward.1} parent=1 // pred_fallthru
      _
    // Predicated region
    $region34: #{model_forward.1} parent=1 // pred_check
      _
    $region35: #{model_forward.1} parent=1 // pred_check_branch
      %63 = sbr.rel (0) target = $region37
    $region36: #{model_forward.1} parent=1 // pred_region
      %65 = vsyncadd [#allocation6], 0
      %s67 = sshll.u32 %s8, 4
      %s68 = int_to_ptr.hbm [resolvable:$true] %s67
      %s69 = sshll.u32 [#allocation7], 4
      %s70 = int_to_ptr.vmem [resolvable:$true] %s69
      %72 = dma.hbm_to_vmem [thread:$0]  %s68, 16, %s70, [#allocation6]
    $region37: #{model_forward.1} parent=1 // pred_fallthru
      _
    // Predicated region
    $region38: #{model_forward.1} parent=1 // pred_check
      _
    $region39: #{model_forward.1} parent=1 // pred_check_branch
      %74 = sbr.rel (0) target = $region41
    $region40: #{model_forward.1} parent=1 // pred_region
      %76 = vsyncadd [#allocation9], 0
      %s78 = sshll.u32 %s9, 4
      %s79 = int_to_ptr.hbm [resolvable:$true] %s78
      %s80 = sshll.u32 [#allocation8], 4
      %s81 = int_to_ptr.vmem [resolvable:$true] %s80
      %83 = dma.hbm_to_vmem [thread:$0]  %s79, 16, %s81, [#allocation9]
    $region41: #{model_forward.1} parent=1 // pred_fallthru
      _
    // Predicated region
    $region42: #{model_forward.1} parent=1 // pred_check
      _
    $region43: #{model_forward.1} parent=1 // pred_check_branch
      %85 = sbr.rel (0) target = $region45
    $region44: #{model_forward.1} parent=1 // pred_region
      _
    $region45: #{model_forward.1} parent=1 // pred_fallthru
      _
    // Predicated region
    $region46: #{model_forward.1} parent=1 // pred_check
      _
    $region47: #{model_forward.1} parent=1 // pred_check_branch
      %87 = sbr.rel (0) target = $region49
    $region48: #{model_forward.1} parent=1 // pred_region
      %89 = vsyncadd [#allocation9], 0
      %s91 = sshll.u32 %s11, 4
      %s92 = int_to_ptr.hbm [resolvable:$true] %s91
      %s93 = sshll.u32 [#allocation10], 4
      %s94 = int_to_ptr.vmem [resolvable:$true] %s93
      %96 = dma.hbm_to_vmem [thread:$0]  %s92, 16, %s94, [#allocation9]
    $region49: #{model_forward.1} parent=1 // pred_fallthru
      _
    // Predicated region
    $region50: #{model_forward.1} parent=1 // pred_check
      _
    $region51: #{model_forward.1} parent=1 // pred_check_branch
      %98 = sbr.rel (0) target = $region53
    $region52: #{model_forward.1} parent=1 // pred_region
      %100 = vsyncadd [#allocation12], 0
      %s101 = sshll.u32 %s12, 4
      %s102 = int_to_ptr.hbm [resolvable:$true] %s101
      %s103 = sshll.u32 [#allocation11], 4
      %s104 = int_to_ptr.vmem [resolvable:$true] %s103
      %109 = dma.hbm_to_vmem [thread:$0]  %s102, 512, %s104, [#allocation12], 128, 128, 8
    $region53: #{model_forward.1} parent=1 // pred_fallthru
      _
    // Predicated region
    $region54: #{model_forward.1} parent=1 // pred_check
      _
    $region55: #{model_forward.1} parent=1 // pred_check_branch
      %111 = sbr.rel (0) target = $region57
    $region56: #{model_forward.1} parent=1 // pred_region
      %113 = vsyncadd [#allocation12], 0
      %s115 = sshll.u32 %s13, 4
      %s116 = int_to_ptr.hbm [resolvable:$true] %s115
      %s117 = sshll.u32 [#allocation13], 4
      %s118 = int_to_ptr.vmem [resolvable:$true] %s117
      %120 = dma.hbm_to_vmem [thread:$0]  %s116, 16, %s118, [#allocation12]
    $region57: #{model_forward.1} parent=1 // pred_fallthru
      _
    // Predicated region
    $region58: #{model_forward.1} parent=1 // pred_check
      _
    $region59: #{model_forward.1} parent=1 // pred_check_branch
      %122 = sbr.rel (0) target = $region61
    $region60: #{model_forward.1} parent=1 // pred_region
      %124 = dma.done [#allocation3], 256
    $region61: #{model_forward.1} parent=1 // pred_fallthru
      _
    // Predicated region
    $region62: #{model_forward.1} parent=1 // pred_check
      _
    $region63: #{model_forward.1} parent=1 // pred_check_branch
      %126 = sbr.rel (0) target = $region65
    $region64: #{model_forward.1} parent=1 // pred_region
      %128 = dma.done [#allocation6], 512
    $region65: #{model_forward.1} parent=1 // pred_fallthru
      _
    // Predicated region
    $region66: #{model_forward.1} parent=1 // pred_check
      _
    $region67: #{model_forward.1} parent=1 // pred_check_branch
      %130 = sbr.rel (0) target = $region69
    $region68: #{model_forward.1} parent=1 // pred_region
      %132 = dma.done [#allocation6], 16
    $region69: #{model_forward.1} parent=1 // pred_fallthru
      _
    // Predicated region
    $region70: #{model_forward.1} parent=1 // pred_check
      _
    $region71: #{model_forward.1} parent=1 // pred_check_branch
      %134 = sbr.rel (0) target = $region73
    $region72: #{model_forward.1} parent=1 // pred_region
      %136 = dma.done [#allocation9], 16
    $region73: #{model_forward.1} parent=1 // pred_fallthru
      _
    // Predicated region
    $region74: #{model_forward.1} parent=1 // pred_check
      _
    $region75: #{model_forward.1} parent=1 // pred_check_branch
      %138 = sbr.rel (0) target = $region77
    $region76: #{model_forward.1} parent=1 // pred_region
      %140 = dma.done [#allocation9], 16
    $region77: #{model_forward.1} parent=1 // pred_fallthru
      _
    // Predicated region
    $region78: #{model_forward.1} parent=1 // pred_check
      _
    $region79: #{model_forward.1} parent=1 // pred_check_branch
      %142 = sbr.rel (0) target = $region81
    $region80: #{model_forward.1} parent=1 // pred_region
      %144 = dma.done [#allocation12], 512
    $region81: #{model_forward.1} parent=1 // pred_fallthru
      _
    // Predicated region
    $region82: #{model_forward.1} parent=1 // pred_check
      _
    $region83: #{model_forward.1} parent=1 // pred_check_branch
      %146 = sbr.rel (0) target = $region85
    $region84: #{model_forward.1} parent=1 // pred_region
      %148 = dma.done [#allocation12], 16
    $region85: #{model_forward.1} parent=1 // pred_fallthru
      _
    %v149 = vld [vmem:[%s0] sm:$0xff]
    %v150 = vld [vmem:[%s0 + $0x8] sm:$0xff]
    %v151 = vld [vmem:[%s1] sm:$0xff]
    %v152 = vld [vmem:[%s1 + $0x8] sm:$0xff]
    %v153 = vld [vmem:[%s1 + $0x10] sm:$0xff]
    %v154 = vld [vmem:[%s1 + $0x18] sm:$0xff]
    %v155 = vld [vmem:[%s2] sm:$0x1]
    %v157 = vperm.slane %v155, 0
    %vm159 = vcmask 261120
    %v161 = vsel %vm159, %v149, 0
    %v164 = vsel %vm159, %v150, 0
    %166 = vmatpush.msra.mxu0 0.0
    %167 = vmatpush.msra.mxu0 0.0
    %168 = vmatpush.msra.mxu0 0.0
    %169 = vmatpush.msra.mxu0 0.0
    %170 = vmatpush.msra.mxu0 0.0
    %171 = vmatpush.msra.mxu0 0.0
    %172 = vmatpush.msra.mxu0 0.0
    %173 = vmatpush.msra.mxu0 0.0
    %174 = vmatpush.msra.mxu0 0.0
    %175 = vmatpush.msra.mxu0 0.0
    %176 = vmatpush.msra.mxu0 0.0
    %177 = vmatpush.msra.mxu0 0.0
    %178 = vmatpush.msra.mxu0 %v154
    %179 = vmatpush.msra.mxu0 %v153
    %180 = vmatpush.msra.mxu0 %v152
    %181 = vmatpush.msra.mxu0 %v151
    %182 = vmatmul.f32.gmra.mxu0 %v161
    %v183 = vpop.f32.mrf.mxu0
    %v184 = vadd.f32 %v157, %v183
    %185 = vmatmul.f32.gmra.mxu0 %v164
    %v186 = vpop.f32.mrf.mxu0
    %v187 = vadd.f32 %v157, %v186
    %188 = vdwg.mxu0
    %v189 = vmax.f32 %v184, 0.0
    %v190 = vmax.f32 %v187, 0.0
    %s191 = scalar_lea.vmem %s0, 16
    %v192 = vld [vmem:[%s191] sm:$0xff]
    %v193 = vld [vmem:[%s191 + $0x8] sm:$0xff]
    %s194 = scalar_lea.vmem %s1, 32
    %v195 = vld [vmem:[%s194] sm:$0xff]
    %v196 = vld [vmem:[%s194 + $0x8] sm:$0xff]
    %v197 = vld [vmem:[%s194 + $0x10] sm:$0xff]
    %v198 = vld [vmem:[%s194 + $0x18] sm:$0xff]
    %s199 = scalar_lea.vmem %s2, 1
    %v200 = vld [vmem:[%s199] sm:$0x1]
    %v202 = vperm.slane %v200, 0
    %v205 = vsel %vm159, %v192, 0
    %v208 = vsel %vm159, %v193, 0
    %210 = vmatpush.msra.mxu0 0.0
    %211 = vmatpush.msra.mxu0 0.0
    %212 = vmatpush.msra.mxu0 0.0
    %213 = vmatpush.msra.mxu0 0.0
    %214 = vmatpush.msra.mxu0 0.0
    %215 = vmatpush.msra.mxu0 0.0
    %216 = vmatpush.msra.mxu0 0.0
    %217 = vmatpush.msra.mxu0 0.0
    %218 = vmatpush.msra.mxu0 0.0
    %219 = vmatpush.msra.mxu0 0.0
    %220 = vmatpush.msra.mxu0 0.0
    %221 = vmatpush.msra.mxu0 0.0
    %222 = vmatpush.msra.mxu0 %v198
    %223 = vmatpush.msra.mxu0 %v197
    %224 = vmatpush.msra.mxu0 %v196
    %225 = vmatpush.msra.mxu0 %v195
    %226 = vmatmul.f32.gmra.mxu0 %v205
    %v227 = vpop.f32.mrf.mxu0
    %v228 = vadd.f32 %v202, %v227
    %229 = vmatmul.f32.gmra.mxu0 %v208
    %v230 = vpop.f32.mrf.mxu0
    %v231 = vadd.f32 %v202, %v230
    %232 = vdwg.mxu0
    %v233 = vmax.f32 %v228, 0.0
    %v234 = vmax.f32 %v231, 0.0
    %s235 = scalar_lea.vmem %s0, 32
    %v236 = vld [vmem:[%s235] sm:$0xff]
    %v237 = vld [vmem:[%s235 + $0x8] sm:$0xff]
    %s238 = scalar_lea.vmem %s1, 64
    %v239 = vld [vmem:[%s238] sm:$0xff]
    %v240 = vld [vmem:[%s238 + $0x8] sm:$0xff]
    %v241 = vld [vmem:[%s238 + $0x10] sm:$0xff]
    %v242 = vld [vmem:[%s238 + $0x18] sm:$0xff]
    %s243 = scalar_lea.vmem %s2, 2
    %v244 = vld [vmem:[%s243] sm:$0x1]
    %v246 = vperm.slane %v244, 0
    %v249 = vsel %vm159, %v236, 0
    %v252 = vsel %vm159, %v237, 0
    %254 = vmatpush.msra.mxu0 0.0
    %255 = vmatpush.msra.mxu0 0.0
    %256 = vmatpush.msra.mxu0 0.0
    %257 = vmatpush.msra.mxu0 0.0
    %258 = vmatpush.msra.mxu0 0.0
    %259 = vmatpush.msra.mxu0 0.0
    %260 = vmatpush.msra.mxu0 0.0
    %261 = vmatpush.msra.mxu0 0.0
    %262 = vmatpush.msra.mxu0 0.0
    %263 = vmatpush.msra.mxu0 0.0
    %264 = vmatpush.msra.mxu0 0.0
    %265 = vmatpush.msra.mxu0 0.0
    %266 = vmatpush.msra.mxu0 %v242
    %267 = vmatpush.msra.mxu0 %v241
    %268 = vmatpush.msra.mxu0 %v240
    %269 = vmatpush.msra.mxu0 %v239
    %270 = vmatmul.f32.gmra.mxu0 %v249
    %v271 = vpop.f32.mrf.mxu0
    %v272 = vadd.f32 %v246, %v271
    %273 = vmatmul.f32.gmra.mxu0 %v252
    %v274 = vpop.f32.mrf.mxu0
    %v275 = vadd.f32 %v246, %v274
    %276 = vdwg.mxu0
    %v277 = vmax.f32 %v272, 0.0
    %v278 = vmax.f32 %v275, 0.0
    %s279 = scalar_lea.vmem %s0, 48
    %v280 = vld [vmem:[%s279] sm:$0xff]
    %v281 = vld [vmem:[%s279 + $0x8] sm:$0xff]
    %s282 = scalar_lea.vmem %s1, 96
    %v283 = vld [vmem:[%s282] sm:$0xff]
    %v284 = vld [vmem:[%s282 + $0x8] sm:$0xff]
    %v285 = vld [vmem:[%s282 + $0x10] sm:$0xff]
    %v286 = vld [vmem:[%s282 + $0x18] sm:$0xff]
    %s287 = scalar_lea.vmem %s2, 3
    %v288 = vld [vmem:[%s287] sm:$0x1]
    %v290 = vperm.slane %v288, 0
    %v293 = vsel %vm159, %v280, 0
    %v296 = vsel %vm159, %v281, 0
    %298 = vmatpush.msra.mxu0 0.0
    %299 = vmatpush.msra.mxu0 0.0
    %300 = vmatpush.msra.mxu0 0.0
    %301 = vmatpush.msra.mxu0 0.0
    %302 = vmatpush.msra.mxu0 0.0
    %303 = vmatpush.msra.mxu0 0.0
    %304 = vmatpush.msra.mxu0 0.0
    %305 = vmatpush.msra.mxu0 0.0
    %306 = vmatpush.msra.mxu0 0.0
    %307 = vmatpush.msra.mxu0 0.0
    %308 = vmatpush.msra.mxu0 0.0
    %309 = vmatpush.msra.mxu0 0.0
    %310 = vmatpush.msra.mxu0 %v286
    %311 = vmatpush.msra.mxu0 %v285
    %312 = vmatpush.msra.mxu0 %v284
    %313 = vmatpush.msra.mxu0 %v283
    %314 = vmatmul.f32.gmra.mxu0 %v293
    %v315 = vpop.f32.mrf.mxu0
    %v316 = vadd.f32 %v290, %v315
    %317 = vmatmul.f32.gmra.mxu0 %v296
    %v318 = vpop.f32.mrf.mxu0
    %v319 = vadd.f32 %v290, %v318
    %320 = vdwg.mxu0
    %v321 = vmax.f32 %v316, 0.0
    %v322 = vmax.f32 %v319, 0.0
    %v323 = vld [vmem:[%s5] sm:$0xff]
    %v324 = vld [vmem:[%s5 + $0x8] sm:$0xff]
    %v325 = vld [vmem:[%s5 + $0x10] sm:$0xff]
    %v326 = vld [vmem:[%s5 + $0x18] sm:$0xff]
    %v327 = vld [vmem:[%s6] sm:$0x1]
    %v329 = vperm.slane %v327, 0
    %v332 = vsel %vm159, %v189, 0
    %v335 = vsel %vm159, %v190, 0
    %v338 = vsel %vm159, %v233, 0
    %v341 = vsel %vm159, %v234, 0
    %v344 = vsel %vm159, %v277, 0
    %v347 = vsel %vm159, %v278, 0
    %v350 = vsel %vm159, %v321, 0
    %v353 = vsel %vm159, %v322, 0
    %355 = vmatpush.msra.mxu0 0.0
    %356 = vmatpush.msra.mxu0 0.0
    %357 = vmatpush.msra.mxu0 0.0
    %358 = vmatpush.msra.mxu0 0.0
    %359 = vmatpush.msra.mxu0 0.0
    %360 = vmatpush.msra.mxu0 0.0
    %361 = vmatpush.msra.mxu0 0.0
    %362 = vmatpush.msra.mxu0 0.0
    %363 = vmatpush.msra.mxu0 0.0
    %364 = vmatpush.msra.mxu0 0.0
    %365 = vmatpush.msra.mxu0 0.0
    %366 = vmatpush.msra.mxu0 0.0
    %367 = vmatpush.msra.mxu0 %v326
    %368 = vmatpush.msra.mxu0 %v325
    %369 = vmatpush.msra.mxu0 %v324
    %370 = vmatpush.msra.mxu0 %v323
    %371 = vmatmul.f32.gmra.mxu0 %v332
    %v372 = vpop.f32.mrf.mxu0
    %v373 = vadd.f32 %v329, %v372
    %374 = vmatmul.f32.gmra.mxu0 %v335
    %v375 = vpop.f32.mrf.mxu0
    %v376 = vadd.f32 %v329, %v375
    %377 = vmatmul.f32.gmra.mxu0 %v332
    %v378 = vpop.f32.mrf.mxu0
    %v379 = vadd.f32 %v329, %v378
    %380 = vmatmul.f32.gmra.mxu0 %v335
    %v381 = vpop.f32.mrf.mxu0
    %v382 = vadd.f32 %v329, %v381
    %383 = vmatmul.f32.gmra.mxu0 %v338
    %v384 = vpop.f32.mrf.mxu0
    %v385 = vadd.f32 %v329, %v384
    %386 = vmatmul.f32.gmra.mxu0 %v341
    %v387 = vpop.f32.mrf.mxu0
    %v388 = vadd.f32 %v329, %v387
    %389 = vmatmul.f32.gmra.mxu0 %v338
    %v390 = vpop.f32.mrf.mxu0
    %v391 = vadd.f32 %v329, %v390
    %392 = vmatmul.f32.gmra.mxu0 %v341
    %v393 = vpop.f32.mrf.mxu0
    %v394 = vadd.f32 %v329, %v393
    %395 = vmatmul.f32.gmra.mxu0 %v344
    %v396 = vpop.f32.mrf.mxu0
    %v397 = vadd.f32 %v329, %v396
    %398 = vmatmul.f32.gmra.mxu0 %v347
    %v399 = vpop.f32.mrf.mxu0
    %v400 = vadd.f32 %v329, %v399
    %401 = vmatmul.f32.gmra.mxu0 %v344
    %v402 = vpop.f32.mrf.mxu0
    %v403 = vadd.f32 %v329, %v402
    %404 = vmatmul.f32.gmra.mxu0 %v347
    %v405 = vpop.f32.mrf.mxu0
    %v406 = vadd.f32 %v329, %v405
    %407 = vmatmul.f32.gmra.mxu0 %v350
    %v408 = vpop.f32.mrf.mxu0
    %v409 = vadd.f32 %v329, %v408
    %410 = vmatmul.f32.gmra.mxu0 %v353
    %v411 = vpop.f32.mrf.mxu0
    %v412 = vadd.f32 %v329, %v411
    %413 = vmatmul.f32.gmra.mxu0 %v350
    %v414 = vpop.f32.mrf.mxu0
    %v415 = vadd.f32 %v329, %v414
    %416 = vmatmul.f32.gmra.mxu0 %v353
    %v417 = vpop.f32.mrf.mxu0
    %v418 = vadd.f32 %v329, %v417
    %419 = vdwg.mxu0
    %v420 = vld [vmem:[#allocation2] sm:$0xff]
    %v421 = vld [vmem:[#allocation2 + $0x8] sm:$0xff]
    %vm422 = vcmask 130048
    %v424 = vsel %vm422, %v420, 0
    %v427 = vsel %vm422, %v421, 0
    %429 = vmatpush.msra.mxu0 0.0
    %430 = vmatpush.msra.mxu0 0.0
    %431 = vmatpush.msra.mxu0 0.0
    %432 = vmatpush.msra.mxu0 0.0
    %433 = vmatpush.msra.mxu0 0.0
    %434 = vmatpush.msra.mxu0 0.0
    %435 = vmatpush.msra.mxu0 0.0
    %436 = vmatpush.msra.mxu0 0.0
    %437 = vmatpush.msra.mxu0 0.0
    %438 = vmatpush.msra.mxu0 0.0
    %439 = vmatpush.msra.mxu0 0.0
    %440 = vmatpush.msra.mxu0 0.0
    %441 = vmatpush.msra.mxu0 0.0
    %442 = vmatpush.msra.mxu0 0.0
    %443 = vmatpush.msra.mxu0 %v376
    %444 = vmatpush.msra.mxu0 %v373
    %445 = vmatmul.f32.gmra.mxu0 %v424
    %v446 = vpop.f32.mrf.mxu0
    %v447 = vadd.f32 0.0, %v446
    %448 = vmatmul.f32.gmra.mxu0 %v427
    %v449 = vpop.f32.mrf.mxu0
    %v450 = vadd.f32 0.0, %v449
    %451 = vdwg.mxu0
    %v452 = vld [vmem:[%s4] sm:$0xff]
    %v453 = vld [vmem:[%s4 + $0x8] sm:$0xff]
    %v455 = vsel %vm422, %v452, 0
    %v458 = vsel %vm422, %v453, 0
    %460 = vmatpush.msra.mxu0 0.0
    %461 = vmatpush.msra.mxu0 0.0
    %462 = vmatpush.msra.mxu0 0.0
    %463 = vmatpush.msra.mxu0 0.0
    %464 = vmatpush.msra.mxu0 0.0
    %465 = vmatpush.msra.mxu0 0.0
    %466 = vmatpush.msra.mxu0 0.0
    %467 = vmatpush.msra.mxu0 0.0
    %468 = vmatpush.msra.mxu0 0.0
    %469 = vmatpush.msra.mxu0 0.0
    %470 = vmatpush.msra.mxu0 0.0
    %471 = vmatpush.msra.mxu0 0.0
    %472 = vmatpush.msra.mxu0 0.0
    %473 = vmatpush.msra.mxu0 0.0
    %474 = vmatpush.msra.mxu0 %v382
    %475 = vmatpush.msra.mxu0 %v379
    %476 = vmatmul.f32.gmra.mxu0 %v455
    %v477 = vpop.f32.mrf.mxu0
    %v478 = vadd.f32 0.0, %v477
    %479 = vmatmul.f32.gmra.mxu0 %v458
    %v480 = vpop.f32.mrf.mxu0
    %v481 = vadd.f32 0.0, %v480
    %482 = vdwg.mxu0
    %483 = vmatpush.msra.mxu0 0.0
    %484 = vmatpush.msra.mxu0 0.0
    %485 = vmatpush.msra.mxu0 0.0
    %486 = vmatpush.msra.mxu0 0.0
    %487 = vmatpush.msra.mxu0 0.0
    %488 = vmatpush.msra.mxu0 0.0
    %489 = vmatpush.msra.mxu0 0.0
    %490 = vmatpush.msra.mxu0 0.0
    %491 = vmatpush.msra.mxu0 0.0
    %492 = vmatpush.msra.mxu0 0.0
    %493 = vmatpush.msra.mxu0 0.0
    %494 = vmatpush.msra.mxu0 0.0
    %495 = vmatpush.msra.mxu0 0.0
    %496 = vmatpush.msra.mxu0 0.0
    %497 = vmatpush.msra.mxu0 %v388
    %498 = vmatpush.msra.mxu0 %v385
    %499 = vmatmul.f32.gmra.mxu0 %v424
    %v500 = vpop.f32.mrf.mxu0
    %v501 = vadd.f32 0.0, %v500
    %502 = vmatmul.f32.gmra.mxu0 %v427
    %v503 = vpop.f32.mrf.mxu0
    %v504 = vadd.f32 0.0, %v503
    %505 = vdwg.mxu0
    %506 = vmatpush.msra.mxu0 0.0
    %507 = vmatpush.msra.mxu0 0.0
    %508 = vmatpush.msra.mxu0 0.0
    %509 = vmatpush.msra.mxu0 0.0
    %510 = vmatpush.msra.mxu0 0.0
    %511 = vmatpush.msra.mxu0 0.0
    %512 = vmatpush.msra.mxu0 0.0
    %513 = vmatpush.msra.mxu0 0.0
    %514 = vmatpush.msra.mxu0 0.0
    %515 = vmatpush.msra.mxu0 0.0
    %516 = vmatpush.msra.mxu0 0.0
    %517 = vmatpush.msra.mxu0 0.0
    %518 = vmatpush.msra.mxu0 0.0
    %519 = vmatpush.msra.mxu0 0.0
    %520 = vmatpush.msra.mxu0 %v394
    %521 = vmatpush.msra.mxu0 %v391
    %522 = vmatmul.f32.gmra.mxu0 %v455
    %v523 = vpop.f32.mrf.mxu0
    %v524 = vadd.f32 0.0, %v523
    %525 = vmatmul.f32.gmra.mxu0 %v458
    %v526 = vpop.f32.mrf.mxu0
    %v527 = vadd.f32 0.0, %v526
    %528 = vdwg.mxu0
    %529 = vmatpush.msra.mxu0 0.0
    %530 = vmatpush.msra.mxu0 0.0
    %531 = vmatpush.msra.mxu0 0.0
    %532 = vmatpush.msra.mxu0 0.0
    %533 = vmatpush.msra.mxu0 0.0
    %534 = vmatpush.msra.mxu0 0.0
    %535 = vmatpush.msra.mxu0 0.0
    %536 = vmatpush.msra.mxu0 0.0
    %537 = vmatpush.msra.mxu0 0.0
    %538 = vmatpush.msra.mxu0 0.0
    %539 = vmatpush.msra.mxu0 0.0
    %540 = vmatpush.msra.mxu0 0.0
    %541 = vmatpush.msra.mxu0 0.0
    %542 = vmatpush.msra.mxu0 0.0
    %543 = vmatpush.msra.mxu0 %v400
    %544 = vmatpush.msra.mxu0 %v397
    %545 = vmatmul.f32.gmra.mxu0 %v424
    %v546 = vpop.f32.mrf.mxu0
    %v547 = vadd.f32 0.0, %v546
    %548 = vmatmul.f32.gmra.mxu0 %v427
    %v549 = vpop.f32.mrf.mxu0
    %v550 = vadd.f32 0.0, %v549
    %551 = vdwg.mxu0
    %s552 = scalar_lea.vmem %s4, 16
    %v553 = vld [vmem:[%s552] sm:$0xff]
    %v554 = vld [vmem:[%s552 + $0x8] sm:$0xff]
    %v556 = vsel %vm422, %v553, 0
    %v559 = vsel %vm422, %v554, 0
    %561 = vmatpush.msra.mxu0 0.0
    %562 = vmatpush.msra.mxu0 0.0
    %563 = vmatpush.msra.mxu0 0.0
    %564 = vmatpush.msra.mxu0 0.0
    %565 = vmatpush.msra.mxu0 0.0
    %566 = vmatpush.msra.mxu0 0.0
    %567 = vmatpush.msra.mxu0 0.0
    %568 = vmatpush.msra.mxu0 0.0
    %569 = vmatpush.msra.mxu0 0.0
    %570 = vmatpush.msra.mxu0 0.0
    %571 = vmatpush.msra.mxu0 0.0
    %572 = vmatpush.msra.mxu0 0.0
    %573 = vmatpush.msra.mxu0 0.0
    %574 = vmatpush.msra.mxu0 0.0
    %575 = vmatpush.msra.mxu0 %v406
    %576 = vmatpush.msra.mxu0 %v403
    %577 = vmatmul.f32.gmra.mxu0 %v556
    %v578 = vpop.f32.mrf.mxu0
    %v579 = vadd.f32 0.0, %v578
    %580 = vmatmul.f32.gmra.mxu0 %v559
    %v581 = vpop.f32.mrf.mxu0
    %v582 = vadd.f32 0.0, %v581
    %583 = vdwg.mxu0
    %584 = vmatpush.msra.mxu0 0.0
    %585 = vmatpush.msra.mxu0 0.0
    %586 = vmatpush.msra.mxu0 0.0
    %587 = vmatpush.msra.mxu0 0.0
    %588 = vmatpush.msra.mxu0 0.0
    %589 = vmatpush.msra.mxu0 0.0
    %590 = vmatpush.msra.mxu0 0.0
    %591 = vmatpush.msra.mxu0 0.0
    %592 = vmatpush.msra.mxu0 0.0
    %593 = vmatpush.msra.mxu0 0.0
    %594 = vmatpush.msra.mxu0 0.0
    %595 = vmatpush.msra.mxu0 0.0
    %596 = vmatpush.msra.mxu0 0.0
    %597 = vmatpush.msra.mxu0 0.0
    %598 = vmatpush.msra.mxu0 %v412
    %599 = vmatpush.msra.mxu0 %v409
    %600 = vmatmul.f32.gmra.mxu0 %v424
    %v601 = vpop.f32.mrf.mxu0
    %v602 = vadd.f32 0.0, %v601
    %603 = vmatmul.f32.gmra.mxu0 %v427
    %v604 = vpop.f32.mrf.mxu0
    %v605 = vadd.f32 0.0, %v604
    %606 = vdwg.mxu0
    %607 = vmatpush.msra.mxu0 0.0
    %608 = vmatpush.msra.mxu0 0.0
    %609 = vmatpush.msra.mxu0 0.0
    %610 = vmatpush.msra.mxu0 0.0
    %611 = vmatpush.msra.mxu0 0.0
    %612 = vmatpush.msra.mxu0 0.0
    %613 = vmatpush.msra.mxu0 0.0
    %614 = vmatpush.msra.mxu0 0.0
    %615 = vmatpush.msra.mxu0 0.0
    %616 = vmatpush.msra.mxu0 0.0
    %617 = vmatpush.msra.mxu0 0.0
    %618 = vmatpush.msra.mxu0 0.0
    %619 = vmatpush.msra.mxu0 0.0
    %620 = vmatpush.msra.mxu0 0.0
    %621 = vmatpush.msra.mxu0 %v418
    %622 = vmatpush.msra.mxu0 %v415
    %623 = vmatmul.f32.gmra.mxu0 %v556
    %v624 = vpop.f32.mrf.mxu0
    %v625 = vadd.f32 0.0, %v624
    %626 = vmatmul.f32.gmra.mxu0 %v559
    %v627 = vpop.f32.mrf.mxu0
    %v628 = vadd.f32 0.0, %v627
    %629 = vdwg.mxu0
    %v630 = vmax.f32 %v447, 0.0
    %v631 = vmax.f32 %v450, 0.0
    %v632 = vmax.f32 %v478, 0.0
    %v633 = vmax.f32 %v481, 0.0
    %v634 = vmax.f32 %v501, 0.0
    %v635 = vmax.f32 %v504, 0.0
    %v636 = vmax.f32 %v524, 0.0
    %v637 = vmax.f32 %v527, 0.0
    %v638 = vmax.f32 %v547, 0.0
    %v639 = vmax.f32 %v550, 0.0
    %v640 = vmax.f32 %v579, 0.0
    %v641 = vmax.f32 %v582, 0.0
    %v642 = vmax.f32 %v602, 0.0
    %v643 = vmax.f32 %v605, 0.0
    %v644 = vmax.f32 %v625, 0.0
    %v645 = vmax.f32 %v628, 0.0
    %s646 = scalar_lea.vmem %s5, 32
    %v647 = vld [vmem:[%s646] sm:$0xff]
    %v648 = vld [vmem:[%s646 + $0x8] sm:$0xff]
    %v649 = vld [vmem:[%s646 + $0x10] sm:$0xff]
    %v650 = vld [vmem:[%s646 + $0x18] sm:$0xff]
    %s651 = scalar_lea.vmem %s6, 1
    %v652 = vld [vmem:[%s651] sm:$0x1]
    %v654 = vperm.slane %v652, 0
    %v657 = vsel %vm159, %v630, 0
    %v660 = vsel %vm159, %v631, 0
    %v663 = vsel %vm159, %v632, 0
    %v666 = vsel %vm159, %v633, 0
    %v669 = vsel %vm159, %v634, 0
    %v672 = vsel %vm159, %v635, 0
    %v675 = vsel %vm159, %v636, 0
    %v678 = vsel %vm159, %v637, 0
    %v681 = vsel %vm159, %v638, 0
    %v684 = vsel %vm159, %v639, 0
    %v687 = vsel %vm159, %v640, 0
    %v690 = vsel %vm159, %v641, 0
    %v693 = vsel %vm159, %v642, 0
    %v696 = vsel %vm159, %v643, 0
    %v699 = vsel %vm159, %v644, 0
    %v702 = vsel %vm159, %v645, 0
    %704 = vmatpush.msra.mxu0 0.0
    %705 = vmatpush.msra.mxu0 0.0
    %706 = vmatpush.msra.mxu0 0.0
    %707 = vmatpush.msra.mxu0 0.0
    %708 = vmatpush.msra.mxu0 0.0
    %709 = vmatpush.msra.mxu0 0.0
    %710 = vmatpush.msra.mxu0 0.0
    %711 = vmatpush.msra.mxu0 0.0
    %712 = vmatpush.msra.mxu0 0.0
    %713 = vmatpush.msra.mxu0 0.0
    %714 = vmatpush.msra.mxu0 0.0
    %715 = vmatpush.msra.mxu0 0.0
    %716 = vmatpush.msra.mxu0 %v650
    %717 = vmatpush.msra.mxu0 %v649
    %718 = vmatpush.msra.mxu0 %v648
    %719 = vmatpush.msra.mxu0 %v647
    %720 = vmatmul.f32.gmra.mxu0 %v657
    %v721 = vpop.f32.mrf.mxu0
    %v722 = vadd.f32 %v654, %v721
    %723 = vmatmul.f32.gmra.mxu0 %v660
    %v724 = vpop.f32.mrf.mxu0
    %v725 = vadd.f32 %v654, %v724
    %726 = vmatmul.f32.gmra.mxu0 %v663
    %v727 = vpop.f32.mrf.mxu0
    %v728 = vadd.f32 %v654, %v727
    %729 = vmatmul.f32.gmra.mxu0 %v666
    %v730 = vpop.f32.mrf.mxu0
    %v731 = vadd.f32 %v654, %v730
    %732 = vmatmul.f32.gmra.mxu0 %v669
    %v733 = vpop.f32.mrf.mxu0
    %v734 = vadd.f32 %v654, %v733
    %735 = vmatmul.f32.gmra.mxu0 %v672
    %v736 = vpop.f32.mrf.mxu0
    %v737 = vadd.f32 %v654, %v736
    %738 = vmatmul.f32.gmra.mxu0 %v675
    %v739 = vpop.f32.mrf.mxu0
    %v740 = vadd.f32 %v654, %v739
    %741 = vmatmul.f32.gmra.mxu0 %v678
    %v742 = vpop.f32.mrf.mxu0
    %v743 = vadd.f32 %v654, %v742
    %744 = vmatmul.f32.gmra.mxu0 %v681
    %v745 = vpop.f32.mrf.mxu0
    %v746 = vadd.f32 %v654, %v745
    %747 = vmatmul.f32.gmra.mxu0 %v684
    %v748 = vpop.f32.mrf.mxu0
    %v749 = vadd.f32 %v654, %v748
    %750 = vmatmul.f32.gmra.mxu0 %v687
    %v751 = vpop.f32.mrf.mxu0
    %v752 = vadd.f32 %v654, %v751
    %753 = vmatmul.f32.gmra.mxu0 %v690
    %v754 = vpop.f32.mrf.mxu0
    %v755 = vadd.f32 %v654, %v754
    %756 = vmatmul.f32.gmra.mxu0 %v693
    %v757 = vpop.f32.mrf.mxu0
    %v758 = vadd.f32 %v654, %v757
    %759 = vmatmul.f32.gmra.mxu0 %v696
    %v760 = vpop.f32.mrf.mxu0
    %v761 = vadd.f32 %v654, %v760
    %762 = vmatmul.f32.gmra.mxu0 %v699
    %v763 = vpop.f32.mrf.mxu0
    %v764 = vadd.f32 %v654, %v763
    %765 = vmatmul.f32.gmra.mxu0 %v702
    %v766 = vpop.f32.mrf.mxu0
    %v767 = vadd.f32 %v654, %v766
    %768 = vdwg.mxu0
    %769 = vmatpush.msra.mxu0 0.0
    %770 = vmatpush.msra.mxu0 0.0
    %771 = vmatpush.msra.mxu0 0.0
    %772 = vmatpush.msra.mxu0 0.0
    %773 = vmatpush.msra.mxu0 0.0
    %774 = vmatpush.msra.mxu0 0.0
    %775 = vmatpush.msra.mxu0 0.0
    %776 = vmatpush.msra.mxu0 0.0
    %777 = vmatpush.msra.mxu0 0.0
    %778 = vmatpush.msra.mxu0 0.0
    %779 = vmatpush.msra.mxu0 0.0
    %780 = vmatpush.msra.mxu0 0.0
    %781 = vmatpush.msra.mxu0 0.0
    %782 = vmatpush.msra.mxu0 0.0
    %783 = vmatpush.msra.mxu0 %v725
    %784 = vmatpush.msra.mxu0 %v722
    %785 = vmatmul.f32.gmra.mxu0 %v424
    %v786 = vpop.f32.mrf.mxu0
    %v787 = vadd.f32 0.0, %v786
    %788 = vmatmul.f32.gmra.mxu0 %v427
    %v789 = vpop.f32.mrf.mxu0
    %v790 = vadd.f32 0.0, %v789
    %791 = vdwg.mxu0
    %792 = vmatpush.msra.mxu0 0.0
    %793 = vmatpush.msra.mxu0 0.0
    %794 = vmatpush.msra.mxu0 0.0
    %795 = vmatpush.msra.mxu0 0.0
    %796 = vmatpush.msra.mxu0 0.0
    %797 = vmatpush.msra.mxu0 0.0
    %798 = vmatpush.msra.mxu0 0.0
    %799 = vmatpush.msra.mxu0 0.0
    %800 = vmatpush.msra.mxu0 0.0
    %801 = vmatpush.msra.mxu0 0.0
    %802 = vmatpush.msra.mxu0 0.0
    %803 = vmatpush.msra.mxu0 0.0
    %804 = vmatpush.msra.mxu0 0.0
    %805 = vmatpush.msra.mxu0 0.0
    %806 = vmatpush.msra.mxu0 %v731
    %807 = vmatpush.msra.mxu0 %v728
    %808 = vmatmul.f32.gmra.mxu0 %v455
    %v809 = vpop.f32.mrf.mxu0
    %v810 = vadd.f32 0.0, %v809
    %811 = vmatmul.f32.gmra.mxu0 %v458
    %v812 = vpop.f32.mrf.mxu0
    %v813 = vadd.f32 0.0, %v812
    %814 = vdwg.mxu0
    %815 = vmatpush.msra.mxu0 0.0
    %816 = vmatpush.msra.mxu0 0.0
    %817 = vmatpush.msra.mxu0 0.0
    %818 = vmatpush.msra.mxu0 0.0
    %819 = vmatpush.msra.mxu0 0.0
    %820 = vmatpush.msra.mxu0 0.0
    %821 = vmatpush.msra.mxu0 0.0
    %822 = vmatpush.msra.mxu0 0.0
    %823 = vmatpush.msra.mxu0 0.0
    %824 = vmatpush.msra.mxu0 0.0
    %825 = vmatpush.msra.mxu0 0.0
    %826 = vmatpush.msra.mxu0 0.0
    %827 = vmatpush.msra.mxu0 0.0
    %828 = vmatpush.msra.mxu0 0.0
    %829 = vmatpush.msra.mxu0 %v737
    %830 = vmatpush.msra.mxu0 %v734
    %831 = vmatmul.f32.gmra.mxu0 %v424
    %v832 = vpop.f32.mrf.mxu0
    %v833 = vadd.f32 0.0, %v832
    %834 = vmatmul.f32.gmra.mxu0 %v427
    %v835 = vpop.f32.mrf.mxu0
    %v836 = vadd.f32 0.0, %v835
    %837 = vdwg.mxu0
    %838 = vmatpush.msra.mxu0 0.0
    %839 = vmatpush.msra.mxu0 0.0
    %840 = vmatpush.msra.mxu0 0.0
    %841 = vmatpush.msra.mxu0 0.0
    %842 = vmatpush.msra.mxu0 0.0
    %843 = vmatpush.msra.mxu0 0.0
    %844 = vmatpush.msra.mxu0 0.0
    %845 = vmatpush.msra.mxu0 0.0
    %846 = vmatpush.msra.mxu0 0.0
    %847 = vmatpush.msra.mxu0 0.0
    %848 = vmatpush.msra.mxu0 0.0
    %849 = vmatpush.msra.mxu0 0.0
    %850 = vmatpush.msra.mxu0 0.0
    %851 = vmatpush.msra.mxu0 0.0
    %852 = vmatpush.msra.mxu0 %v743
    %853 = vmatpush.msra.mxu0 %v740
    %854 = vmatmul.f32.gmra.mxu0 %v455
    %v855 = vpop.f32.mrf.mxu0
    %v856 = vadd.f32 0.0, %v855
    %857 = vmatmul.f32.gmra.mxu0 %v458
    %v858 = vpop.f32.mrf.mxu0
    %v859 = vadd.f32 0.0, %v858
    %860 = vdwg.mxu0
    %861 = vmatpush.msra.mxu0 0.0
    %862 = vmatpush.msra.mxu0 0.0
    %863 = vmatpush.msra.mxu0 0.0
    %864 = vmatpush.msra.mxu0 0.0
    %865 = vmatpush.msra.mxu0 0.0
    %866 = vmatpush.msra.mxu0 0.0
    %867 = vmatpush.msra.mxu0 0.0
    %868 = vmatpush.msra.mxu0 0.0
    %869 = vmatpush.msra.mxu0 0.0
    %870 = vmatpush.msra.mxu0 0.0
    %871 = vmatpush.msra.mxu0 0.0
    %872 = vmatpush.msra.mxu0 0.0
    %873 = vmatpush.msra.mxu0 0.0
    %874 = vmatpush.msra.mxu0 0.0
    %875 = vmatpush.msra.mxu0 %v749
    %876 = vmatpush.msra.mxu0 %v746
    %877 = vmatmul.f32.gmra.mxu0 %v424
    %v878 = vpop.f32.mrf.mxu0
    %v879 = vadd.f32 0.0, %v878
    %880 = vmatmul.f32.gmra.mxu0 %v427
    %v881 = vpop.f32.mrf.mxu0
    %v882 = vadd.f32 0.0, %v881
    %883 = vdwg.mxu0
    %884 = vmatpush.msra.mxu0 0.0
    %885 = vmatpush.msra.mxu0 0.0
    %886 = vmatpush.msra.mxu0 0.0
    %887 = vmatpush.msra.mxu0 0.0
    %888 = vmatpush.msra.mxu0 0.0
    %889 = vmatpush.msra.mxu0 0.0
    %890 = vmatpush.msra.mxu0 0.0
    %891 = vmatpush.msra.mxu0 0.0
    %892 = vmatpush.msra.mxu0 0.0
    %893 = vmatpush.msra.mxu0 0.0
    %894 = vmatpush.msra.mxu0 0.0
    %895 = vmatpush.msra.mxu0 0.0
    %896 = vmatpush.msra.mxu0 0.0
    %897 = vmatpush.msra.mxu0 0.0
    %898 = vmatpush.msra.mxu0 %v755
    %899 = vmatpush.msra.mxu0 %v752
    %900 = vmatmul.f32.gmra.mxu0 %v556
    %v901 = vpop.f32.mrf.mxu0
    %v902 = vadd.f32 0.0, %v901
    %903 = vmatmul.f32.gmra.mxu0 %v559
    %v904 = vpop.f32.mrf.mxu0
    %v905 = vadd.f32 0.0, %v904
    %906 = vdwg.mxu0
    %907 = vmatpush.msra.mxu0 0.0
    %908 = vmatpush.msra.mxu0 0.0
    %909 = vmatpush.msra.mxu0 0.0
    %910 = vmatpush.msra.mxu0 0.0
    %911 = vmatpush.msra.mxu0 0.0
    %912 = vmatpush.msra.mxu0 0.0
    %913 = vmatpush.msra.mxu0 0.0
    %914 = vmatpush.msra.mxu0 0.0
    %915 = vmatpush.msra.mxu0 0.0
    %916 = vmatpush.msra.mxu0 0.0
    %917 = vmatpush.msra.mxu0 0.0
    %918 = vmatpush.msra.mxu0 0.0
    %919 = vmatpush.msra.mxu0 0.0
    %920 = vmatpush.msra.mxu0 0.0
    %921 = vmatpush.msra.mxu0 %v761
    %922 = vmatpush.msra.mxu0 %v758
    %923 = vmatmul.f32.gmra.mxu0 %v424
    %v924 = vpop.f32.mrf.mxu0
    %v925 = vadd.f32 0.0, %v924
    %926 = vmatmul.f32.gmra.mxu0 %v427
    %v927 = vpop.f32.mrf.mxu0
    %v928 = vadd.f32 0.0, %v927
    %929 = vdwg.mxu0
    %930 = vmatpush.msra.mxu0 0.0
    %931 = vmatpush.msra.mxu0 0.0
    %932 = vmatpush.msra.mxu0 0.0
    %933 = vmatpush.msra.mxu0 0.0
    %934 = vmatpush.msra.mxu0 0.0
    %935 = vmatpush.msra.mxu0 0.0
    %936 = vmatpush.msra.mxu0 0.0
    %937 = vmatpush.msra.mxu0 0.0
    %938 = vmatpush.msra.mxu0 0.0
    %939 = vmatpush.msra.mxu0 0.0
    %940 = vmatpush.msra.mxu0 0.0
    %941 = vmatpush.msra.mxu0 0.0
    %942 = vmatpush.msra.mxu0 0.0
    %943 = vmatpush.msra.mxu0 0.0
    %944 = vmatpush.msra.mxu0 %v767
    %945 = vmatpush.msra.mxu0 %v764
    %946 = vmatmul.f32.gmra.mxu0 %v556
    %v947 = vpop.f32.mrf.mxu0
    %v948 = vadd.f32 0.0, %v947
    %949 = vmatmul.f32.gmra.mxu0 %v559
    %v950 = vpop.f32.mrf.mxu0
    %v951 = vadd.f32 0.0, %v950
    %952 = vdwg.mxu0
    %v953 = vmax.f32 %v787, 0.0
    %v954 = vmax.f32 %v790, 0.0
    %v955 = vmax.f32 %v810, 0.0
    %v956 = vmax.f32 %v813, 0.0
    %v957 = vmax.f32 %v833, 0.0
    %v958 = vmax.f32 %v836, 0.0
    %v959 = vmax.f32 %v856, 0.0
    %v960 = vmax.f32 %v859, 0.0
    %v961 = vmax.f32 %v879, 0.0
    %v962 = vmax.f32 %v882, 0.0
    %v963 = vmax.f32 %v902, 0.0
    %v964 = vmax.f32 %v905, 0.0
    %v965 = vmax.f32 %v925, 0.0
    %v966 = vmax.f32 %v928, 0.0
    %v967 = vmax.f32 %v948, 0.0
    %v968 = vmax.f32 %v951, 0.0
    %v969 = vadd.f32 %v953, 0.0
    %v970 = vadd.f32 %v954, 0.0
    %v971 = vadd.f32 %v969, %v957
    %v972 = vadd.f32 %v970, %v958
    %v973 = vmul.f32 %v971, 0.5
    %v974 = vmul.f32 %v972, 0.5
    %v975 = vadd.f32 %v955, 0.0
    %v976 = vadd.f32 %v956, 0.0
    %v977 = vadd.f32 %v975, %v959
    %v978 = vadd.f32 %v976, %v960
    %v979 = vmul.f32 %v977, 0.5
    %v980 = vmul.f32 %v978, 0.5
    %v981 = vadd.f32 %v961, 0.0
    %v982 = vadd.f32 %v962, 0.0
    %v983 = vadd.f32 %v981, %v965
    %v984 = vadd.f32 %v982, %v966
    %v985 = vmul.f32 %v983, 0.5
    %v986 = vmul.f32 %v984, 0.5
    %v987 = vadd.f32 %v963, 0.0
    %v988 = vadd.f32 %v964, 0.0
    %v989 = vadd.f32 %v987, %v967
    %v990 = vadd.f32 %v988, %v968
    %v991 = vmul.f32 %v989, 0.5
    %v992 = vmul.f32 %v990, 0.5
    %v993 = vadd.f32 %v973, %v979
    %v994 = vadd.f32 %v974, %v980
    %v995 = vmul.f32 %v993, 0.5
    %v996 = vmul.f32 %v994, 0.5
    %v997 = vadd.f32 %v985, %v991
    %v998 = vadd.f32 %v986, %v992
    %v999 = vmul.f32 %v997, 0.5
    %v1000 = vmul.f32 %v998, 0.5
    %v1001 = vld [vmem:[#allocation5] sm:$0xff]
    %v1002 = vld [vmem:[#allocation5 + $0x8] sm:$0xff]
    %v1003 = vld [vmem:[#allocation5 + $0x10] sm:$0xff]
    %v1004 = vld [vmem:[#allocation5 + $0x18] sm:$0xff]
    %v1005 = vld [vmem:[#allocation7] sm:$0x1]
    %v1006 = vld [vmem:[#allocation8] sm:$0x1]
    %v1008 = vperm.slane %v1005, 0
    %v1011 = vsel %vm159, %v995, 0
    %v1014 = vsel %vm159, %v996, 0
    %1016 = vmatpush.msra.mxu0 0.0
    %1017 = vmatpush.msra.mxu0 0.0
    %1018 = vmatpush.msra.mxu0 0.0
    %1019 = vmatpush.msra.mxu0 0.0
    %1020 = vmatpush.msra.mxu0 0.0
    %1021 = vmatpush.msra.mxu0 0.0
    %1022 = vmatpush.msra.mxu0 0.0
    %1023 = vmatpush.msra.mxu0 0.0
    %1024 = vmatpush.msra.mxu0 0.0
    %1025 = vmatpush.msra.mxu0 0.0
    %1026 = vmatpush.msra.mxu0 0.0
    %1027 = vmatpush.msra.mxu0 0.0
    %1028 = vmatpush.msra.mxu0 %v1004
    %1029 = vmatpush.msra.mxu0 %v1003
    %1030 = vmatpush.msra.mxu0 %v1002
    %1031 = vmatpush.msra.mxu0 %v1001
    %1032 = vmatmul.f32.gmra.mxu0 %v1011
    %v1033 = vpop.f32.mrf.mxu0
    %v1034 = vadd.f32 %v1008, %v1033
    %1035 = vmatmul.f32.gmra.mxu0 %v1014
    %v1036 = vpop.f32.mrf.mxu0
    %v1037 = vadd.f32 %v1008, %v1036
    %1038 = vdwg.mxu0
    %v1039 = vtanh.pop %v1034
    %v1040 = vtanh.pop %v1037
    %v1041 = vsel %vm159, %v1039, 0.0
    %v1042 = vsel %vm159, %v1040, 0.0
    %v1043 = vadd.f32 %v1041, %v1042
    %v1044 = vrot.slane %v1043, 4
    %v1045 = vadd.f32 %v1043, %v1044
    %v1046 = vrot.slane %v1045, 2
    %v1047 = vadd.f32 %v1045, %v1046
    %v1048 = vrot.slane %v1047, 1
    %v1049 = vadd.f32 %v1047, %v1048
    %v1050 = vrcp.pop 16.0
    %v1051 = vmul.f32 16.0, %v1050
    %v1052 = vsub.f32 1.0, %v1051
    %v1053 = vmul.f32 %v1050, %v1052
    %v1054 = vadd.f32 %v1050, %v1053
    %vm1055 = vweird.f32 %v1050
    %v1056 = vsel %vm1055, %v1050, %v1054
    %v1057 = vmul.f32 %v1049, %v1056
    %v1058 = vmul.f32 %v1057, %v1006
    %vm1059 = vcmask 253952
    %v1060 = vsel %vm1059, %v1058, 0.0
    %1061 = vadd.xlane.f32.xlu0 %v1060
    %v1062 = vpop.xlane.xlu0 %1061
    %v1064 = vsel %vm159, %v999, 0
    %v1067 = vsel %vm159, %v1000, 0
    %1069 = vmatpush.msra.mxu0 0.0
    %1070 = vmatpush.msra.mxu0 0.0
    %1071 = vmatpush.msra.mxu0 0.0
    %1072 = vmatpush.msra.mxu0 0.0
    %1073 = vmatpush.msra.mxu0 0.0
    %1074 = vmatpush.msra.mxu0 0.0
    %1075 = vmatpush.msra.mxu0 0.0
    %1076 = vmatpush.msra.mxu0 0.0
    %1077 = vmatpush.msra.mxu0 0.0
    %1078 = vmatpush.msra.mxu0 0.0
    %1079 = vmatpush.msra.mxu0 0.0
    %1080 = vmatpush.msra.mxu0 0.0
    %1081 = vmatpush.msra.mxu0 %v1004
    %1082 = vmatpush.msra.mxu0 %v1003
    %1083 = vmatpush.msra.mxu0 %v1002
    %1084 = vmatpush.msra.mxu0 %v1001
    %1085 = vmatmul.f32.gmra.mxu0 %v1064
    %v1086 = vpop.f32.mrf.mxu0
    %v1087 = vadd.f32 %v1008, %v1086
    %1088 = vmatmul.f32.gmra.mxu0 %v1067
    %v1089 = vpop.f32.mrf.mxu0
    %v1090 = vadd.f32 %v1008, %v1089
    %1091 = vdwg.mxu0
    %v1092 = vtanh.pop %v1087
    %v1093 = vtanh.pop %v1090
    %v1094 = vsel %vm159, %v1092, 0.0
    %v1095 = vsel %vm159, %v1093, 0.0
    %v1096 = vadd.f32 %v1094, %v1095
    %v1097 = vrot.slane %v1096, 4
    %v1098 = vadd.f32 %v1096, %v1097
    %v1099 = vrot.slane %v1098, 2
    %v1100 = vadd.f32 %v1098, %v1099
    %v1101 = vrot.slane %v1100, 1
    %v1102 = vadd.f32 %v1100, %v1101
    %v1103 = vmul.f32 %v1102, %v1056
    %v1104 = vmul.f32 %v1103, %v1006
    %v1105 = vsel %vm1059, %v1104, 0.0
    %1106 = vadd.xlane.f32.xlu0 %v1105
    %v1107 = vpop.xlane.xlu0 %1106
    %v1108 = vmax.f32 %v1062, %v1107
    %v1109 = vsub.f32 %v1062, %v1108
    %v1110 = vmul.f32 %v1109, 1.442695
    %v1111 = vpow.pop %v1110
    %v1112 = vsub.f32 %v1107, %v1108
    %v1113 = vmul.f32 %v1112, 1.442695
    %v1114 = vpow.pop %v1113
    %v1115 = vadd.f32 %v1111, %v1114
    %v1116 = vrcp.pop %v1115
    %v1117 = vmul.f32 %v1115, %v1116
    %v1118 = vsub.f32 1.0, %v1117
    %v1119 = vmul.f32 %v1116, %v1118
    %v1120 = vadd.f32 %v1116, %v1119
    %vm1121 = vweird.f32 %v1115
    %vm1122 = vweird.f32 %v1116
    %vm1123 = vmor %vm1121, %vm1122
    %v1124 = vsel %vm1123, %v1116, %v1120
    %v1125 = vand.u32 2147483647, %v1115
    %vm1126 = vcmp.eq.f32.partialorder %v1125, 8.507059e+37
    %v1127 = vand.u32 %v1115, 2147483648
    %v1128 = vor.u32 1.1754944e-38, %v1127
    %v1129 = vsel %vm1126, %v1128, %v1124
    %v1130 = vmul.f32 1.0, %v1129
    %v1131 = vmul.f32 %v1111, %v1130
    %v1132 = vperm.slane %v1131, 0
    %v1133 = vmul.f32 %v1132, %v995
    %v1134 = vmul.f32 %v1132, %v996
    %v1135 = vmul.f32 %v1114, %v1130
    %v1136 = vperm.slane %v1135, 0
    %v1137 = vmul.f32 %v1136, %v999
    %v1138 = vmul.f32 %v1136, %v1000
    %v1139 = vadd.f32 %v1133, %v1137
    %v1140 = vadd.f32 %v1134, %v1138
    %v1141 = vld [vmem:[%s10] sm:$0xff]
    %v1142 = vld [vmem:[%s10 + $0x8] sm:$0xff]
    %v1143 = vld [vmem:[%s10 + $0x10] sm:$0xff]
    %v1144 = vld [vmem:[%s10 + $0x18] sm:$0xff]
    %v1145 = vld [vmem:[%s10 + $0x20] sm:$0xff]
    %v1146 = vld [vmem:[%s10 + $0x28] sm:$0xff]
    %v1147 = vld [vmem:[%s10 + $0x30] sm:$0xff]
    %v1148 = vld [vmem:[%s10 + $0x38] sm:$0xff]
    %v1150 = vsel %vm159, %v955, 0
    %v1153 = vsel %vm159, %v956, 0
    %v1156 = vsel %vm159, %v959, 0
    %v1159 = vsel %vm159, %v960, 0
    %v1162 = vsel %vm159, %v963, 0
    %v1165 = vsel %vm159, %v964, 0
    %v1168 = vsel %vm159, %v967, 0
    %v1171 = vsel %vm159, %v968, 0
    %1173 = vmatpush.msra.mxu0 0.0
    %1174 = vmatpush.msra.mxu0 0.0
    %1175 = vmatpush.msra.mxu0 0.0
    %1176 = vmatpush.msra.mxu0 0.0
    %1177 = vmatpush.msra.mxu0 0.0
    %1178 = vmatpush.msra.mxu0 0.0
    %1179 = vmatpush.msra.mxu0 0.0
    %1180 = vmatpush.msra.mxu0 0.0
    %1181 = vmatpush.msra.mxu0 0.0
    %1182 = vmatpush.msra.mxu0 0.0
    %1183 = vmatpush.msra.mxu0 0.0
    %1184 = vmatpush.msra.mxu0 0.0
    %1185 = vmatpush.msra.mxu0 %v1148
    %1186 = vmatpush.msra.mxu0 %v1147
    %1187 = vmatpush.msra.mxu0 %v1146
    %1188 = vmatpush.msra.mxu0 %v1145
    %1189 = vmatmul.f32.gmra.mxu0 %v1150
    %v1190 = vpop.f32.mrf.mxu0
    %v1191 = vadd.f32 0.0, %v1190
    %1192 = vmatmul.f32.gmra.mxu0 %v1153
    %v1193 = vpop.f32.mrf.mxu0
    %v1194 = vadd.f32 0.0, %v1193
    %1195 = vmatmul.f32.gmra.mxu0 %v1156
    %v1196 = vpop.f32.mrf.mxu0
    %v1197 = vadd.f32 0.0, %v1196
    %1198 = vmatmul.f32.gmra.mxu0 %v1159
    %v1199 = vpop.f32.mrf.mxu0
    %v1200 = vadd.f32 0.0, %v1199
    %1201 = vmatmul.f32.gmra.mxu0 %v1162
    %v1202 = vpop.f32.mrf.mxu0
    %v1203 = vadd.f32 0.0, %v1202
    %1204 = vmatmul.f32.gmra.mxu0 %v1165
    %v1205 = vpop.f32.mrf.mxu0
    %v1206 = vadd.f32 0.0, %v1205
    %1207 = vmatmul.f32.gmra.mxu0 %v1168
    %v1208 = vpop.f32.mrf.mxu0
    %v1209 = vadd.f32 0.0, %v1208
    %1210 = vmatmul.f32.gmra.mxu0 %v1171
    %v1211 = vpop.f32.mrf.mxu0
    %v1212 = vadd.f32 0.0, %v1211
    %1213 = vdwg.mxu0
    %v1215 = vsel %vm159, %v953, 0
    %v1218 = vsel %vm159, %v954, 0
    %v1221 = vsel %vm159, %v957, 0
    %v1224 = vsel %vm159, %v958, 0
    %v1227 = vsel %vm159, %v961, 0
    %v1230 = vsel %vm159, %v962, 0
    %v1233 = vsel %vm159, %v965, 0
    %v1236 = vsel %vm159, %v966, 0
    %1238 = vmatpush.msra.mxu0 0.0
    %1239 = vmatpush.msra.mxu0 0.0
    %1240 = vmatpush.msra.mxu0 0.0
    %1241 = vmatpush.msra.mxu0 0.0
    %1242 = vmatpush.msra.mxu0 0.0
    %1243 = vmatpush.msra.mxu0 0.0
    %1244 = vmatpush.msra.mxu0 0.0
    %1245 = vmatpush.msra.mxu0 0.0
    %1246 = vmatpush.msra.mxu0 0.0
    %1247 = vmatpush.msra.mxu0 0.0
    %1248 = vmatpush.msra.mxu0 0.0
    %1249 = vmatpush.msra.mxu0 0.0
    %1250 = vmatpush.msra.mxu0 %v1144
    %1251 = vmatpush.msra.mxu0 %v1143
    %1252 = vmatpush.msra.mxu0 %v1142
    %1253 = vmatpush.msra.mxu0 %v1141
    %1254 = vmatmul.f32.gmra.mxu0 %v1215
    %v1255 = vpop.f32.mrf.mxu0
    %v1256 = vadd.f32 %v1191, %v1255
    %1257 = vmatmul.f32.gmra.mxu0 %v1218
    %v1258 = vpop.f32.mrf.mxu0
    %v1259 = vadd.f32 %v1194, %v1258
    %1260 = vmatmul.f32.gmra.mxu0 %v1221
    %v1261 = vpop.f32.mrf.mxu0
    %v1262 = vadd.f32 %v1197, %v1261
    %1263 = vmatmul.f32.gmra.mxu0 %v1224
    %v1264 = vpop.f32.mrf.mxu0
    %v1265 = vadd.f32 %v1200, %v1264
    %1266 = vmatmul.f32.gmra.mxu0 %v1227
    %v1267 = vpop.f32.mrf.mxu0
    %v1268 = vadd.f32 %v1203, %v1267
    %1269 = vmatmul.f32.gmra.mxu0 %v1230
    %v1270 = vpop.f32.mrf.mxu0
    %v1271 = vadd.f32 %v1206, %v1270
    %1272 = vmatmul.f32.gmra.mxu0 %v1233
    %v1273 = vpop.f32.mrf.mxu0
    %v1274 = vadd.f32 %v1209, %v1273
    %1275 = vmatmul.f32.gmra.mxu0 %v1236
    %v1276 = vpop.f32.mrf.mxu0
    %v1277 = vadd.f32 %v1212, %v1276
    %1278 = vdwg.mxu0
    %v1279 = vld [vmem:[#allocation10] sm:$0x1]
    %v1281 = vperm.slane %v1279, 0
    %v1283 = vadd.f32 %v1256, %v1281
    %v1284 = vadd.f32 %v1259, %v1281
    %v1285 = vadd.f32 %v1262, %v1281
    %v1286 = vadd.f32 %v1265, %v1281
    %v1287 = vadd.f32 %v1268, %v1281
    %v1288 = vadd.f32 %v1271, %v1281
    %v1289 = vadd.f32 %v1274, %v1281
    %v1290 = vadd.f32 %v1277, %v1281
    %vm1291 = vcmp.gt.f32.partialorder %v1283, 0.0
    %vm1292 = vcmp.gt.f32.partialorder %v1284, 0.0
    %vm1293 = vcmp.gt.f32.partialorder %v1285, 0.0
    %vm1294 = vcmp.gt.f32.partialorder %v1286, 0.0
    %vm1295 = vcmp.gt.f32.partialorder %v1287, 0.0
    %vm1296 = vcmp.gt.f32.partialorder %v1288, 0.0
    %vm1297 = vcmp.gt.f32.partialorder %v1289, 0.0
    %vm1298 = vcmp.gt.f32.partialorder %v1290, 0.0
    %v1299 = vmin.f32 %v1283, 0.0
    %v1300 = vmin.f32 %v1284, 0.0
    %v1301 = vmin.f32 %v1285, 0.0
    %v1302 = vmin.f32 %v1286, 0.0
    %v1303 = vmin.f32 %v1287, 0.0
    %v1304 = vmin.f32 %v1288, 0.0
    %v1305 = vmin.f32 %v1289, 0.0
    %v1306 = vmin.f32 %v1290, 0.0
    %v1307 = vmul.f32 %v1299, 1.442695
    %v1308 = vpow.pop %v1307
    %v1309 = vmul.f32 %v1300, 1.442695
    %v1310 = vpow.pop %v1309
    %v1311 = vmul.f32 %v1301, 1.442695
    %v1312 = vpow.pop %v1311
    %v1313 = vmul.f32 %v1302, 1.442695
    %v1314 = vpow.pop %v1313
    %v1315 = vmul.f32 %v1303, 1.442695
    %v1316 = vpow.pop %v1315
    %v1317 = vmul.f32 %v1304, 1.442695
    %v1318 = vpow.pop %v1317
    %v1319 = vmul.f32 %v1305, 1.442695
    %v1320 = vpow.pop %v1319
    %v1321 = vmul.f32 %v1306, 1.442695
    %v1322 = vpow.pop %v1321
    %v1323 = vsub.f32 %v1308, 1.0
    %v1324 = vsub.f32 %v1310, 1.0
    %v1325 = vsub.f32 %v1312, 1.0
    %v1326 = vsub.f32 %v1314, 1.0
    %v1327 = vsub.f32 %v1316, 1.0
    %v1328 = vsub.f32 %v1318, 1.0
    %v1329 = vsub.f32 %v1320, 1.0
    %v1330 = vsub.f32 %v1322, 1.0
    %v1331 = vsel %vm1291, %v1283, %v1323
    %v1332 = vsel %vm1292, %v1284, %v1324
    %v1333 = vsel %vm1293, %v1285, %v1325
    %v1334 = vsel %vm1294, %v1286, %v1326
    %v1335 = vsel %vm1295, %v1287, %v1327
    %v1336 = vsel %vm1296, %v1288, %v1328
    %v1337 = vsel %vm1297, %v1289, %v1329
    %v1338 = vsel %vm1298, %v1290, %v1330
    %v1339 = vld [vmem:[#allocation11] sm:$0xff]
    %v1340 = vld [vmem:[#allocation11 + $0x8] sm:$0xff]
    %v1341 = vld [vmem:[#allocation11 + $0x10] sm:$0xff]
    %v1342 = vld [vmem:[#allocation11 + $0x18] sm:$0xff]
    %v1343 = vld [vmem:[#allocation13] sm:$0x1]
    %v1345 = vperm.slane %v1343, 0
    %v1348 = vsel %vm159, %v1331, 0
    %v1351 = vsel %vm159, %v1332, 0
    %v1354 = vsel %vm159, %v1333, 0
    %v1357 = vsel %vm159, %v1334, 0
    %v1360 = vsel %vm159, %v1335, 0
    %v1363 = vsel %vm159, %v1336, 0
    %v1366 = vsel %vm159, %v1337, 0
    %v1369 = vsel %vm159, %v1338, 0
    %1371 = vmatpush.msra.mxu0 0.0
    %1372 = vmatpush.msra.mxu0 0.0
    %1373 = vmatpush.msra.mxu0 0.0
    %1374 = vmatpush.msra.mxu0 0.0
    %1375 = vmatpush.msra.mxu0 0.0
    %1376 = vmatpush.msra.mxu0 0.0
    %1377 = vmatpush.msra.mxu0 0.0
    %1378 = vmatpush.msra.mxu0 0.0
    %1379 = vmatpush.msra.mxu0 0.0
    %1380 = vmatpush.msra.mxu0 0.0
    %1381 = vmatpush.msra.mxu0 0.0
    %1382 = vmatpush.msra.mxu0 0.0
    %1383 = vmatpush.msra.mxu0 %v1342
    %1384 = vmatpush.msra.mxu0 %v1341
    %1385 = vmatpush.msra.mxu0 %v1340
    %1386 = vmatpush.msra.mxu0 %v1339
    %1387 = vmatmul.f32.gmra.mxu0 %v1348
    %v1388 = vpop.f32.mrf.mxu0
    %v1389 = vadd.f32 %v1345, %v1388
    %1390 = vmatmul.f32.gmra.mxu0 %v1351
    %v1391 = vpop.f32.mrf.mxu0
    %v1392 = vadd.f32 %v1345, %v1391
    %1393 = vmatmul.f32.gmra.mxu0 %v1354
    %v1394 = vpop.f32.mrf.mxu0
    %v1395 = vadd.f32 %v1345, %v1394
    %1396 = vmatmul.f32.gmra.mxu0 %v1357
    %v1397 = vpop.f32.mrf.mxu0
    %v1398 = vadd.f32 %v1345, %v1397
    %1399 = vmatmul.f32.gmra.mxu0 %v1360
    %v1400 = vpop.f32.mrf.mxu0
    %v1401 = vadd.f32 %v1345, %v1400
    %1402 = vmatmul.f32.gmra.mxu0 %v1363
    %v1403 = vpop.f32.mrf.mxu0
    %v1404 = vadd.f32 %v1345, %v1403
    %1405 = vmatmul.f32.gmra.mxu0 %v1366
    %v1406 = vpop.f32.mrf.mxu0
    %v1407 = vadd.f32 %v1345, %v1406
    %1408 = vmatmul.f32.gmra.mxu0 %v1369
    %v1409 = vpop.f32.mrf.mxu0
    %v1410 = vadd.f32 %v1345, %v1409
    %1411 = vdwg.mxu0
    %v1412 = vmul.f32 %v1389, %v1389
    %v1413 = vmul.f32 %v1392, %v1392
    %v1414 = vmul.f32 %v1395, %v1395
    %v1415 = vmul.f32 %v1398, %v1398
    %v1416 = vmul.f32 %v1401, %v1401
    %v1417 = vmul.f32 %v1404, %v1404
    %v1418 = vmul.f32 %v1407, %v1407
    %v1419 = vmul.f32 %v1410, %v1410
    %v1420 = vsel %vm159, %v1412, 0.0
    %1421 = vadd.xlane.f32.xlu0 %v1420
    %v1422 = vpop.xlane.xlu0 %1421
    %v1423 = vsel %vm159, %v1413, 0.0
    %1424 = vadd.xlane.f32.xlu0 %v1423
    %v1425 = vpop.xlane.xlu0 %1424
    %v1426 = vsel %vm159, %v1414, 0.0
    %1427 = vadd.xlane.f32.xlu0 %v1426
    %v1428 = vpop.xlane.xlu0 %1427
    %v1429 = vsel %vm159, %v1415, 0.0
    %1430 = vadd.xlane.f32.xlu0 %v1429
    %v1431 = vpop.xlane.xlu0 %1430
    %v1432 = vsel %vm159, %v1416, 0.0
    %1433 = vadd.xlane.f32.xlu0 %v1432
    %v1434 = vpop.xlane.xlu0 %1433
    %v1435 = vsel %vm159, %v1417, 0.0
    %1436 = vadd.xlane.f32.xlu0 %v1435
    %v1437 = vpop.xlane.xlu0 %1436
    %v1438 = vsel %vm159, %v1418, 0.0
    %1439 = vadd.xlane.f32.xlu0 %v1438
    %v1440 = vpop.xlane.xlu0 %1439
    %v1441 = vsel %vm159, %v1419, 0.0
    %1442 = vadd.xlane.f32.xlu0 %v1441
    %v1443 = vpop.xlane.xlu0 %1442
    %v1444 = vadd.f32 %v1422, 1e-12
    %v1445 = vadd.f32 %v1425, 1e-12
    %v1446 = vadd.f32 %v1428, 1e-12
    %v1447 = vadd.f32 %v1431, 1e-12
    %v1448 = vadd.f32 %v1434, 1e-12
    %v1449 = vadd.f32 %v1437, 1e-12
    %v1450 = vadd.f32 %v1440, 1e-12
    %v1451 = vadd.f32 %v1443, 1e-12
    %v1452 = vrsqrt.pop %v1444
    %v1453 = vmul.f32 %v1452, %v1444
    %v1454 = vmul.f32 %v1453, %v1452
    %v1455 = vmul.f32 0.5, %v1454
    %v1456 = vsub.f32 1.5, %v1455
    %v1457 = vmul.f32 %v1452, %v1456
    %vm1458 = vweird.f32 %v1444
    %vm1459 = vweird.f32 %v1452
    %vm1460 = vmor %vm1458, %vm1459
    %v1461 = vsel %vm1460, %v1452, %v1457
    %v1462 = vrsqrt.pop %v1445
    %v1463 = vmul.f32 %v1462, %v1445
    %v1464 = vmul.f32 %v1463, %v1462
    %v1465 = vmul.f32 0.5, %v1464
    %v1466 = vsub.f32 1.5, %v1465
    %v1467 = vmul.f32 %v1462, %v1466
    %vm1468 = vweird.f32 %v1445
    %vm1469 = vweird.f32 %v1462
    %vm1470 = vmor %vm1468, %vm1469
    %v1471 = vsel %vm1470, %v1462, %v1467
    %v1472 = vrsqrt.pop %v1446
    %v1473 = vmul.f32 %v1472, %v1446
    %v1474 = vmul.f32 %v1473, %v1472
    %v1475 = vmul.f32 0.5, %v1474
    %v1476 = vsub.f32 1.5, %v1475
    %v1477 = vmul.f32 %v1472, %v1476
    %vm1478 = vweird.f32 %v1446
    %vm1479 = vweird.f32 %v1472
    %vm1480 = vmor %vm1478, %vm1479
    %v1481 = vsel %vm1480, %v1472, %v1477
    %v1482 = vrsqrt.pop %v1447
    %v1483 = vmul.f32 %v1482, %v1447
    %v1484 = vmul.f32 %v1483, %v1482
    %v1485 = vmul.f32 0.5, %v1484
    %v1486 = vsub.f32 1.5, %v1485
    %v1487 = vmul.f32 %v1482, %v1486
    %vm1488 = vweird.f32 %v1447
    %vm1489 = vweird.f32 %v1482
    %vm1490 = vmor %vm1488, %vm1489
    %v1491 = vsel %vm1490, %v1482, %v1487
    %v1492 = vrsqrt.pop %v1448
    %v1493 = vmul.f32 %v1492, %v1448
    %v1494 = vmul.f32 %v1493, %v1492
    %v1495 = vmul.f32 0.5, %v1494
    %v1496 = vsub.f32 1.5, %v1495
    %v1497 = vmul.f32 %v1492, %v1496
    %vm1498 = vweird.f32 %v1448
    %vm1499 = vweird.f32 %v1492
    %vm1500 = vmor %vm1498, %vm1499
    %v1501 = vsel %vm1500, %v1492, %v1497
    %v1502 = vrsqrt.pop %v1449
    %v1503 = vmul.f32 %v1502, %v1449
    %v1504 = vmul.f32 %v1503, %v1502
    %v1505 = vmul.f32 0.5, %v1504
    %v1506 = vsub.f32 1.5, %v1505
    %v1507 = vmul.f32 %v1502, %v1506
    %vm1508 = vweird.f32 %v1449
    %vm1509 = vweird.f32 %v1502
    %vm1510 = vmor %vm1508, %vm1509
    %v1511 = vsel %vm1510, %v1502, %v1507
    %v1512 = vrsqrt.pop %v1450
    %v1513 = vmul.f32 %v1512, %v1450
    %v1514 = vmul.f32 %v1513, %v1512
    %v1515 = vmul.f32 0.5, %v1514
    %v1516 = vsub.f32 1.5, %v1515
    %v1517 = vmul.f32 %v1512, %v1516
    %vm1518 = vweird.f32 %v1450
    %vm1519 = vweird.f32 %v1512
    %vm1520 = vmor %vm1518, %vm1519
    %v1521 = vsel %vm1520, %v1512, %v1517
    %v1522 = vrsqrt.pop %v1451
    %v1523 = vmul.f32 %v1522, %v1451
    %v1524 = vmul.f32 %v1523, %v1522
    %v1525 = vmul.f32 0.5, %v1524
    %v1526 = vsub.f32 1.5, %v1525
    %v1527 = vmul.f32 %v1522, %v1526
    %vm1528 = vweird.f32 %v1451
    %vm1529 = vweird.f32 %v1522
    %vm1530 = vmor %vm1528, %vm1529
    %v1531 = vsel %vm1530, %v1522, %v1527
    %v1532 = vmul.f32 %v1389, %v1461
    %v1533 = vmul.f32 %v1392, %v1471
    %v1534 = vmul.f32 %v1395, %v1481
    %v1535 = vmul.f32 %v1398, %v1491
    %v1536 = vmul.f32 %v1401, %v1501
    %v1537 = vmul.f32 %v1404, %v1511
    %v1538 = vmul.f32 %v1407, %v1521
    %v1539 = vmul.f32 %v1410, %v1531
    %v1540 = vmul.f32 %v149, %v149
    %v1541 = vmul.f32 %v150, %v150
    %v1542 = vmul.f32 %v192, %v192
    %v1543 = vmul.f32 %v193, %v193
    %v1544 = vmul.f32 %v236, %v236
    %v1545 = vmul.f32 %v237, %v237
    %v1546 = vmul.f32 %v280, %v280
    %v1547 = vmul.f32 %v281, %v281
    %v1548 = vsel %vm159, %v1540, 0.0
    %1549 = vadd.xlane.f32.xlu0 %v1548
    %v1550 = vpop.xlane.xlu0 %1549
    %v1551 = vsel %vm159, %v1541, 0.0
    %1552 = vadd.xlane.f32.xlu0 %v1551
    %v1553 = vpop.xlane.xlu0 %1552
    %v1554 = vsel %vm159, %v1542, 0.0
    %1555 = vadd.xlane.f32.xlu0 %v1554
    %v1556 = vpop.xlane.xlu0 %1555
    %v1557 = vsel %vm159, %v1543, 0.0
    %1558 = vadd.xlane.f32.xlu0 %v1557
    %v1559 = vpop.xlane.xlu0 %1558
    %v1560 = vsel %vm159, %v1544, 0.0
    %1561 = vadd.xlane.f32.xlu0 %v1560
    %v1562 = vpop.xlane.xlu0 %1561
    %v1563 = vsel %vm159, %v1545, 0.0
    %1564 = vadd.xlane.f32.xlu0 %v1563
    %v1565 = vpop.xlane.xlu0 %1564
    %v1566 = vsel %vm159, %v1546, 0.0
    %1567 = vadd.xlane.f32.xlu0 %v1566
    %v1568 = vpop.xlane.xlu0 %1567
    %v1569 = vsel %vm159, %v1547, 0.0
    %1570 = vadd.xlane.f32.xlu0 %v1569
    %v1571 = vpop.xlane.xlu0 %1570
    %v1572 = vadd.f32 %v1550, 1e-12
    %v1573 = vadd.f32 %v1553, 1e-12
    %v1574 = vadd.f32 %v1556, 1e-12
    %v1575 = vadd.f32 %v1559, 1e-12
    %v1576 = vadd.f32 %v1562, 1e-12
    %v1577 = vadd.f32 %v1565, 1e-12
    %v1578 = vadd.f32 %v1568, 1e-12
    %v1579 = vadd.f32 %v1571, 1e-12
    %v1580 = vrsqrt.pop %v1572
    %v1581 = vmul.f32 %v1580, %v1572
    %v1582 = vmul.f32 %v1581, %v1580
    %v1583 = vmul.f32 0.5, %v1582
    %v1584 = vsub.f32 1.5, %v1583
    %v1585 = vmul.f32 %v1580, %v1584
    %vm1586 = vweird.f32 %v1572
    %vm1587 = vweird.f32 %v1580
    %vm1588 = vmor %vm1586, %vm1587
    %v1589 = vsel %vm1588, %v1580, %v1585
    %v1590 = vrsqrt.pop %v1573
    %v1591 = vmul.f32 %v1590, %v1573
    %v1592 = vmul.f32 %v1591, %v1590
    %v1593 = vmul.f32 0.5, %v1592
    %v1594 = vsub.f32 1.5, %v1593
    %v1595 = vmul.f32 %v1590, %v1594
    %vm1596 = vweird.f32 %v1573
    %vm1597 = vweird.f32 %v1590
    %vm1598 = vmor %vm1596, %vm1597
    %v1599 = vsel %vm1598, %v1590, %v1595
    %v1600 = vrsqrt.pop %v1574
    %v1601 = vmul.f32 %v1600, %v1574
    %v1602 = vmul.f32 %v1601, %v1600
    %v1603 = vmul.f32 0.5, %v1602
    %v1604 = vsub.f32 1.5, %v1603
    %v1605 = vmul.f32 %v1600, %v1604
    %vm1606 = vweird.f32 %v1574
    %vm1607 = vweird.f32 %v1600
    %vm1608 = vmor %vm1606, %vm1607
    %v1609 = vsel %vm1608, %v1600, %v1605
    %v1610 = vrsqrt.pop %v1575
    %v1611 = vmul.f32 %v1610, %v1575
    %v1612 = vmul.f32 %v1611, %v1610
    %v1613 = vmul.f32 0.5, %v1612
    %v1614 = vsub.f32 1.5, %v1613
    %v1615 = vmul.f32 %v1610, %v1614
    %vm1616 = vweird.f32 %v1575
    %vm1617 = vweird.f32 %v1610
    %vm1618 = vmor %vm1616, %vm1617
    %v1619 = vsel %vm1618, %v1610, %v1615
    %v1620 = vrsqrt.pop %v1576
    %v1621 = vmul.f32 %v1620, %v1576
    %v1622 = vmul.f32 %v1621, %v1620
    %v1623 = vmul.f32 0.5, %v1622
    %v1624 = vsub.f32 1.5, %v1623
    %v1625 = vmul.f32 %v1620, %v1624
    %vm1626 = vweird.f32 %v1576
    %vm1627 = vweird.f32 %v1620
    %vm1628 = vmor %vm1626, %vm1627
    %v1629 = vsel %vm1628, %v1620, %v1625
    %v1630 = vrsqrt.pop %v1577
    %v1631 = vmul.f32 %v1630, %v1577
    %v1632 = vmul.f32 %v1631, %v1630
    %v1633 = vmul.f32 0.5, %v1632
    %v1634 = vsub.f32 1.5, %v1633
    %v1635 = vmul.f32 %v1630, %v1634
    %vm1636 = vweird.f32 %v1577
    %vm1637 = vweird.f32 %v1630
    %vm1638 = vmor %vm1636, %vm1637
    %v1639 = vsel %vm1638, %v1630, %v1635
    %v1640 = vrsqrt.pop %v1578
    %v1641 = vmul.f32 %v1640, %v1578
    %v1642 = vmul.f32 %v1641, %v1640
    %v1643 = vmul.f32 0.5, %v1642
    %v1644 = vsub.f32 1.5, %v1643
    %v1645 = vmul.f32 %v1640, %v1644
    %vm1646 = vweird.f32 %v1578
    %vm1647 = vweird.f32 %v1640
    %vm1648 = vmor %vm1646, %vm1647
    %v1649 = vsel %vm1648, %v1640, %v1645
    %v1650 = vrsqrt.pop %v1579
    %v1651 = vmul.f32 %v1650, %v1579
    %v1652 = vmul.f32 %v1651, %v1650
    %v1653 = vmul.f32 0.5, %v1652
    %v1654 = vsub.f32 1.5, %v1653
    %v1655 = vmul.f32 %v1650, %v1654
    %vm1656 = vweird.f32 %v1579
    %vm1657 = vweird.f32 %v1650
    %vm1658 = vmor %vm1656, %vm1657
    %v1659 = vsel %vm1658, %v1650, %v1655
    %v1660 = vmul.f32 %v149, %v1589
    %v1661 = vmul.f32 %v150, %v1599
    %v1662 = vmul.f32 %v192, %v1609
    %v1663 = vmul.f32 %v193, %v1619
    %v1664 = vmul.f32 %v236, %v1629
    %v1665 = vmul.f32 %v237, %v1639
    %v1666 = vmul.f32 %v280, %v1649
    %v1667 = vmul.f32 %v281, %v1659
    %v1668 = vmul.f32 %v1532, %v1660
    %v1669 = vmul.f32 %v1533, %v1661
    %v1670 = vmul.f32 %v1534, %v1662
    %v1671 = vmul.f32 %v1535, %v1663
    %v1672 = vmul.f32 %v1536, %v1664
    %v1673 = vmul.f32 %v1537, %v1665
    %v1674 = vmul.f32 %v1538, %v1666
    %v1675 = vmul.f32 %v1539, %v1667
    %v1676 = vsel %vm159, %v1668, 0.0
    %1677 = vadd.xlane.f32.xlu0 %v1676
    %v1678 = vpop.xlane.xlu0 %1677
    %v1679 = vsel %vm159, %v1669, 0.0
    %1680 = vadd.xlane.f32.xlu0 %v1679
    %v1681 = vpop.xlane.xlu0 %1680
    %v1682 = vsel %vm159, %v1670, 0.0
    %1683 = vadd.xlane.f32.xlu0 %v1682
    %v1684 = vpop.xlane.xlu0 %1683
    %v1685 = vsel %vm159, %v1671, 0.0
    %1686 = vadd.xlane.f32.xlu0 %v1685
    %v1687 = vpop.xlane.xlu0 %1686
    %v1688 = vsel %vm159, %v1672, 0.0
    %1689 = vadd.xlane.f32.xlu0 %v1688
    %v1690 = vpop.xlane.xlu0 %1689
    %v1691 = vsel %vm159, %v1673, 0.0
    %1692 = vadd.xlane.f32.xlu0 %v1691
    %v1693 = vpop.xlane.xlu0 %1692
    %v1694 = vsel %vm159, %v1674, 0.0
    %1695 = vadd.xlane.f32.xlu0 %v1694
    %v1696 = vpop.xlane.xlu0 %1695
    %v1697 = vsel %vm159, %v1675, 0.0
    %1698 = vadd.xlane.f32.xlu0 %v1697
    %v1699 = vpop.xlane.xlu0 %1698
    %v1700 = vsub.f32 1.0, %v1678
    %v1701 = vsub.f32 1.0, %v1681
    %v1702 = vsub.f32 1.0, %v1684
    %v1703 = vsub.f32 1.0, %v1687
    %v1704 = vsub.f32 1.0, %v1690
    %v1705 = vsub.f32 1.0, %v1693
    %v1706 = vsub.f32 1.0, %v1696
    %v1707 = vsub.f32 1.0, %v1699
    %v1708 = vmul.f32 %v1700, %v1700
    %v1709 = vmul.f32 %v1701, %v1701
    %v1710 = vmul.f32 %v1702, %v1702
    %v1711 = vmul.f32 %v1703, %v1703
    %v1712 = vmul.f32 %v1704, %v1704
    %v1713 = vmul.f32 %v1705, %v1705
    %v1714 = vmul.f32 %v1706, %v1706
    %v1715 = vmul.f32 %v1707, %v1707
    %v1716 = vmul.f32 %v1708, %v1700
    %v1717 = vmul.f32 %v1709, %v1701
    %v1718 = vmul.f32 %v1710, %v1702
    %v1719 = vmul.f32 %v1711, %v1703
    %v1720 = vmul.f32 %v1712, %v1704
    %v1721 = vmul.f32 %v1713, %v1705
    %v1722 = vmul.f32 %v1714, %v1706
    %v1723 = vmul.f32 %v1715, %v1707
    %v1724 = vadd.f32 %v1716, 0.0
    %v1725 = vadd.f32 %v1717, 0.0
    %v1726 = vadd.f32 %v1718, 0.0
    %v1727 = vadd.f32 %v1719, 0.0
    %v1728 = vadd.f32 %v1720, 0.0
    %v1729 = vadd.f32 %v1721, 0.0
    %v1730 = vadd.f32 %v1722, 0.0
    %v1731 = vadd.f32 %v1723, 0.0
    %v1732 = vadd.f32 %v1724, %v1725
    %v1733 = vadd.f32 %v1732, %v1726
    %v1734 = vadd.f32 %v1733, %v1727
    %v1735 = vadd.f32 %v1734, %v1728
    %v1736 = vadd.f32 %v1735, %v1729
    %v1737 = vadd.f32 %v1736, %v1730
    %v1738 = vadd.f32 %v1737, %v1731
    %v1739 = vrot.slane %v1738, 4
    %v1740 = vadd.f32 %v1738, %v1739
    %v1741 = vrot.slane %v1740, 2
    %v1742 = vadd.f32 %v1740, %v1741
    %v1743 = vrot.slane %v1742, 1
    %v1744 = vadd.f32 %v1742, %v1743
    %v1745 = vmul.f32 %v1744, 0.0078125
    %v1746 = vmul.f32 %v1139, %v1139
    %v1747 = vmul.f32 %v1140, %v1140
    %v1748 = vsel %vm159, %v1746, 0.0
    %1749 = vadd.xlane.f32.xlu0 %v1748
    %v1750 = vpop.xlane.xlu0 %1749
    %v1751 = vsel %vm159, %v1747, 0.0
    %1752 = vadd.xlane.f32.xlu0 %v1751
    %v1753 = vpop.xlane.xlu0 %1752
    %v1755 = vsel %vm159, 1.0, 0
    %v1758 = vsel %vm159, %v1746, 0
    %1760 = vmatpush.xpose.msra.mxu0 0.0
    %1761 = vmatpush.xpose.msra.mxu0 0.0
    %1762 = vmatpush.xpose.msra.mxu0 0.0
    %1763 = vmatpush.xpose.msra.mxu0 0.0
    %1764 = vmatpush.xpose.msra.mxu0 0.0
    %1765 = vmatpush.xpose.msra.mxu0 0.0
    %1766 = vmatpush.xpose.msra.mxu0 0.0
    %1767 = vmatpush.xpose.msra.mxu0 0.0
    %1768 = vmatpush.xpose.msra.mxu0 0.0
    %1769 = vmatpush.xpose.msra.mxu0 0.0
    %1770 = vmatpush.xpose.msra.mxu0 0.0
    %1771 = vmatpush.xpose.msra.mxu0 0.0
    %1772 = vmatpush.xpose.msra.mxu0 0.0
    %1773 = vmatpush.xpose.msra.mxu0 0.0
    %1774 = vmatpush.xpose.msra.mxu0 0.0
    %1775 = vmatpush.xpose.msra.mxu0 %v1758
    %1776 = vmatmul.f32.gmra.mxu0 %v1755
    %v1777 = vpop.f32.mrf.mxu0
    %v1778 = vadd.f32 0.0, %v1777
    %1779 = vdwg.mxu0
    %v1781 = vsel %vm159, %v1139, 0
    %v1784 = vsel %vm159, %v1140, 0
    %1786 = vmatpush.xpose.msra.mxu0 0.0
    %1787 = vmatpush.xpose.msra.mxu0 0.0
    %1788 = vmatpush.xpose.msra.mxu0 0.0
    %1789 = vmatpush.xpose.msra.mxu0 0.0
    %1790 = vmatpush.xpose.msra.mxu0 0.0
    %1791 = vmatpush.xpose.msra.mxu0 0.0
    %1792 = vmatpush.xpose.msra.mxu0 0.0
    %1793 = vmatpush.xpose.msra.mxu0 0.0
    %1794 = vmatpush.xpose.msra.mxu0 0.0
    %1795 = vmatpush.xpose.msra.mxu0 0.0
    %1796 = vmatpush.xpose.msra.mxu0 0.0
    %1797 = vmatpush.xpose.msra.mxu0 0.0
    %1798 = vmatpush.xpose.msra.mxu0 0.0
    %1799 = vmatpush.xpose.msra.mxu0 0.0
    %1800 = vmatpush.xpose.msra.mxu0 0.0
    %1801 = vmatpush.xpose.msra.mxu0 %v1781
    %1802 = vmatmul.f32.gmra.mxu0 %v1781
    %v1803 = vpop.f32.mrf.mxu0
    %v1804 = vadd.f32 0.0, %v1803
    %1805 = vmatmul.f32.gmra.mxu0 %v1784
    %v1806 = vpop.f32.mrf.mxu0
    %v1807 = vadd.f32 0.0, %v1806
    %1808 = vdwg.mxu0
    %v1809 = vperm.slane %v1778, 0
    %v1810 = vadd.f32 %v1750, %v1809
    %v1811 = vadd.f32 %v1753, %v1809
    %v1812 = vmul.f32 %v1804, 2.0
    %v1813 = vmul.f32 %v1807, 2.0
    %v1814 = vsub.f32 %v1810, %v1812
    %v1815 = vsub.f32 %v1811, %v1813
    %v1816 = vmax.f32 %v1814, 0.0
    %v1817 = vmax.f32 %v1815, 0.0
    %v1818 = vadd.f32 %v1816, 1.0
    %v1819 = vadd.f32 %v1817, 1.0
    %v1820 = vrcp.pop %v1818
    %v1821 = vmul.f32 %v1818, %v1820
    %v1822 = vsub.f32 1.0, %v1821
    %v1823 = vmul.f32 %v1820, %v1822
    %v1824 = vadd.f32 %v1820, %v1823
    %vm1825 = vweird.f32 %v1818
    %vm1826 = vweird.f32 %v1820
    %vm1827 = vmor %vm1825, %vm1826
    %v1828 = vsel %vm1827, %v1820, %v1824
    %v1829 = vand.u32 2147483647, %v1818
    %vm1830 = vcmp.eq.f32.partialorder %v1829, 8.507059e+37
    %v1831 = vand.u32 %v1818, 2147483648
    %v1832 = vor.u32 1.1754944e-38, %v1831
    %v1833 = vsel %vm1830, %v1832, %v1828
    %v1834 = vmul.f32 1.0, %v1833
    %v1835 = vrcp.pop %v1819
    %v1836 = vmul.f32 %v1819, %v1835
    %v1837 = vsub.f32 1.0, %v1836
    %v1838 = vmul.f32 %v1835, %v1837
    %v1839 = vadd.f32 %v1835, %v1838
    %vm1840 = vweird.f32 %v1819
    %vm1841 = vweird.f32 %v1835
    %vm1842 = vmor %vm1840, %vm1841
    %v1843 = vsel %vm1842, %v1835, %v1839
    %v1844 = vand.u32 2147483647, %v1819
    %vm1845 = vcmp.eq.f32.partialorder %v1844, 8.507059e+37
    %v1846 = vand.u32 %v1819, 2147483648
    %v1847 = vor.u32 1.1754944e-38, %v1846
    %v1848 = vsel %vm1845, %v1847, %v1843
    %v1849 = vmul.f32 1.0, %v1848
    %vm1850 = vcmask 31744
    %v1851 = vsel %vm1850, %v1834, 0.0
    %1852 = vadd.xlane.f32.xlu0 %v1851
    %v1853 = vpop.xlane.xlu0 %1852
    %v1854 = vsel %vm1850, %v1849, 0.0
    %1855 = vadd.xlane.f32.xlu0 %v1854
    %v1856 = vpop.xlane.xlu0 %1855
    %v1857 = vadd.f32 %v1853, 1e-08
    %v1858 = vadd.f32 %v1856, 1e-08
    %v1859 = vrcp.pop %v1857
    %v1860 = vmul.f32 %v1857, %v1859
    %v1861 = vsub.f32 1.0, %v1860
    %v1862 = vmul.f32 %v1859, %v1861
    %v1863 = vadd.f32 %v1859, %v1862
    %vm1864 = vweird.f32 %v1857
    %vm1865 = vweird.f32 %v1859
    %vm1866 = vmor %vm1864, %vm1865
    %v1867 = vsel %vm1866, %v1859, %v1863
    %v1868 = vand.u32 2147483647, %v1857
    %vm1869 = vcmp.eq.f32.partialorder %v1868, 8.507059e+37
    %v1870 = vand.u32 %v1857, 2147483648
    %v1871 = vor.u32 1.1754944e-38, %v1870
    %v1872 = vsel %vm1869, %v1871, %v1867
    %v1873 = vmul.f32 %v1834, %v1872
    %v1874 = vrcp.pop %v1858
    %v1875 = vmul.f32 %v1858, %v1874
    %v1876 = vsub.f32 1.0, %v1875
    %v1877 = vmul.f32 %v1874, %v1876
    %v1878 = vadd.f32 %v1874, %v1877
    %vm1879 = vweird.f32 %v1858
    %vm1880 = vweird.f32 %v1874
    %vm1881 = vmor %vm1879, %vm1880
    %v1882 = vsel %vm1881, %v1874, %v1878
    %v1883 = vand.u32 2147483647, %v1858
    %vm1884 = vcmp.eq.f32.partialorder %v1883, 8.507059e+37
    %v1885 = vand.u32 %v1858, 2147483648
    %v1886 = vor.u32 1.1754944e-38, %v1885
    %v1887 = vsel %vm1884, %v1886, %v1882
    %v1888 = vmul.f32 %v1849, %v1887
    %v1889 = vsel %vm1850, %v1873, 0.0
    %v1890 = vsel %vm1850, %v1888, 0.0
    %v1891 = vadd.f32 %v1889, %v1890
    %v1892 = vrot.slane %v1891, 4
    %v1893 = vadd.f32 %v1891, %v1892
    %v1894 = vrot.slane %v1893, 2
    %v1895 = vadd.f32 %v1893, %v1894
    %v1896 = vrot.slane %v1895, 1
    %v1897 = vadd.f32 %v1895, %v1896
    %v1898 = vmul.f32 %v1873, %v1873
    %v1899 = vmul.f32 %v1888, %v1888
    %v1900 = vadd.f32 %v1897, 1e-08
    %v1901 = vrcp.pop %v1900
    %v1902 = vmul.f32 %v1900, %v1901
    %v1903 = vsub.f32 1.0, %v1902
    %v1904 = vmul.f32 %v1901, %v1903
    %v1905 = vadd.f32 %v1901, %v1904
    %vm1906 = vweird.f32 %v1900
    %vm1907 = vweird.f32 %v1901
    %vm1908 = vmor %vm1906, %vm1907
    %v1909 = vsel %vm1908, %v1901, %v1905
    %v1910 = vand.u32 2147483647, %v1900
    %vm1911 = vcmp.eq.f32.partialorder %v1910, 8.507059e+37
    %v1912 = vand.u32 %v1900, 2147483648
    %v1913 = vor.u32 1.1754944e-38, %v1912
    %v1914 = vsel %vm1911, %v1913, %v1909
    %v1915 = vmul.f32 %v1898, %v1914
    %v1916 = vmul.f32 %v1899, %v1914
    %v1917 = vsel %vm1850, %v1915, 0.0
    %1918 = vadd.xlane.f32.xlu0 %v1917
    %v1919 = vpop.xlane.xlu0 %1918
    %v1920 = vsel %vm1850, %v1916, 0.0
    %1921 = vadd.xlane.f32.xlu0 %v1920
    %v1922 = vpop.xlane.xlu0 %1921
    %v1923 = vadd.f32 %v1919, 1e-08
    %v1924 = vadd.f32 %v1922, 1e-08
    %v1925 = vrcp.pop %v1923
    %v1926 = vmul.f32 %v1923, %v1925
    %v1927 = vsub.f32 1.0, %v1926
    %v1928 = vmul.f32 %v1925, %v1927
    %v1929 = vadd.f32 %v1925, %v1928
    %vm1930 = vweird.f32 %v1923
    %vm1931 = vweird.f32 %v1925
    %vm1932 = vmor %vm1930, %vm1931
    %v1933 = vsel %vm1932, %v1925, %v1929
    %v1934 = vand.u32 2147483647, %v1923
    %vm1935 = vcmp.eq.f32.partialorder %v1934, 8.507059e+37
    %v1936 = vand.u32 %v1923, 2147483648
    %v1937 = vor.u32 1.1754944e-38, %v1936
    %v1938 = vsel %vm1935, %v1937, %v1933
    %v1939 = vmul.f32 %v1915, %v1938
    %v1940 = vrcp.pop %v1924
    %v1941 = vmul.f32 %v1924, %v1940
    %v1942 = vsub.f32 1.0, %v1941
    %v1943 = vmul.f32 %v1940, %v1942
    %v1944 = vadd.f32 %v1940, %v1943
    %vm1945 = vweird.f32 %v1924
    %vm1946 = vweird.f32 %v1940
    %vm1947 = vmor %vm1945, %vm1946
    %v1948 = vsel %vm1947, %v1940, %v1944
    %v1949 = vand.u32 2147483647, %v1924
    %vm1950 = vcmp.eq.f32.partialorder %v1949, 8.507059e+37
    %v1951 = vand.u32 %v1924, 2147483648
    %v1952 = vor.u32 1.1754944e-38, %v1951
    %v1953 = vsel %vm1950, %v1952, %v1948
    %v1954 = vmul.f32 %v1916, %v1953
    %v1955 = vadd.f32 %v1939, 1e-08
    %v1956 = vadd.f32 %v1954, 1e-08
    %v1957 = vlog2.pop %v1955
    %v1958 = vmul.f32 %v1957, 0.6931472
    %v1959 = vlog2.pop %v1956
    %v1960 = vmul.f32 %v1959, 0.6931472
    %v1961 = vadd.f32 %v1873, 1e-08
    %v1962 = vadd.f32 %v1888, 1e-08
    %v1963 = vlog2.pop %v1961
    %v1964 = vmul.f32 %v1963, 0.6931472
    %v1965 = vlog2.pop %v1962
    %v1966 = vmul.f32 %v1965, 0.6931472
    %v1967 = vsub.f32 %v1958, %v1964
    %v1968 = vsub.f32 %v1960, %v1966
    %v1969 = vmul.f32 %v1939, %v1967
    %v1970 = vmul.f32 %v1954, %v1968
    %v1971 = vsel %vm1850, %v1969, 0.0
    %1972 = vadd.xlane.f32.xlu0 %v1971
    %v1973 = vpop.xlane.xlu0 %1972
    %v1974 = vsel %vm1850, %v1970, 0.0
    %1975 = vadd.xlane.f32.xlu0 %v1974
    %v1976 = vpop.xlane.xlu0 %1975
    %v1977 = vadd.f32 %v1973, %v1976
    %v1978 = vrot.slane %v1977, 4
    %v1979 = vadd.f32 %v1977, %v1978
    %v1980 = vrot.slane %v1979, 2
    %v1981 = vadd.f32 %v1979, %v1980
    %v1982 = vrot.slane %v1981, 1
    %v1983 = vadd.f32 %v1981, %v1982
    %v1984 = vmul.f32 %v1983, 0.0625
    %v1985 = vadd.f32 %v1745, %v1984
    %vm1986 = vcmask 0
    %1987 = vst.msk [vmem:[#allocation14] sm:$0x1] %vm1986, %v1985
    // Predicated region
    $region86: #{model_forward.1} parent=1 // pred_check
      _
    $region87: #{model_forward.1} parent=1 // pred_check_branch
      %1989 = sbr.rel (0) target = $region89
    $region88: #{model_forward.1} parent=1 // pred_region
      %1991 = vsyncadd [#allocation4], 0
      %s1993 = sshll.u32 [#allocation14], 4
      %s1994 = int_to_ptr.vmem [resolvable:$true] %s1993
      %s1995 = sshll.u32 %s14, 4
      %s1996 = int_to_ptr.hbm [resolvable:$true] %s1995
      %1998 = dma.vmem_to_hbm [thread:$0]  %s1994, 16, %s1996, [#allocation4]
    $region89: #{model_forward.1} parent=1 // pred_fallthru
      _
    // Predicated region
    $region90: #{model_forward.1} parent=1 // pred_check
      _
    $region91: #{model_forward.1} parent=1 // pred_check_branch
      %2000 = sbr.rel (0) target = $region93
    $region92: #{model_forward.1} parent=1 // pred_region
      %2002 = dma.done [#allocation4], 16
    $region93: #{model_forward.1} parent=1 // pred_fallthru
      _
    %2003 = vsyncpa [#allocation3], 1
    %2004 = vsyncpa [#allocation6], 1
    %2005 = vsyncpa [#allocation9], 1
    %2006 = vsyncpa [#allocation12], 1
    %2007 = vsyncpa [#allocation4], 1

</llo_original>
